<compile_context>
chip_gen: v5e
topology: v5e:2x2
jax: 0.10.0
libtpu: 0.0.40
codegen_flags: <defaults>
</compile_context>

<pallas_src>
import math

import jax
import jax.numpy as jnp
import numpy as np
from jax.experimental import pallas as pl
from jax.experimental.pallas import tpu as pltpu  # noqa: F401  (TPU backend)

# ----- model hyper-parameters (small, consistent with the module) -----
D_MODEL = 32
NUM_HEADS = 4
D_K = D_MODEL // NUM_HEADS
NUM_LAYERS = 2
NUM_CLASSES = 3
D_FF = 64
MAX_LEN = 16
SEQ = 8
BATCH = 2
EPS = 1e-5  # nn.LayerNorm default


# ---------------------------------------------------------------------------
# Fused kernel: pos-enc + 2 encoder layers + mean-pool classifier
# ---------------------------------------------------------------------------
def _layer_norm(x, gamma, beta):
    # gamma / beta are pre-broadcast to x.shape at pack time (no broadcasts here)
    mean = jnp.mean(x, axis=-1, keepdims=True)
    var = jnp.mean((x - mean) ** 2, axis=-1, keepdims=True)
    return (x - mean) * jax.lax.rsqrt(var + EPS) * gamma + beta


def fused_forward_kernel(x_ref, w_ref, c_ref, m_ref, o_ref):
    """x_ref:   [N, D]          activations, batch collapsed into sublanes
       w_ref:   [L, 160, 96]    per-layer matmul weights (row-stacked, lane-0 aligned)
       c_ref:   [L, 128, 96]    per-layer biases + LN params, pre-broadcast to N rows
       m_ref:   [56, 32]        pe (tiled over batch) + classifier W^T + bias
       o_ref:   [B, 3]          logits
    """
    N, D = x_ref.shape
    S = SEQ
    B = N // S
    F = D_FF
    H, DK = NUM_HEADS, D_K

    # positional-encoding add (pe pre-tiled over batch, pre-sliced to SEQ rows)
    x = x_ref[...] + m_ref[0:N, :]                                  # [N, D]

    for l in range(NUM_LAYERS):                                     # static tiny loop
        # ---- per-layer constants: static slices of the packed slabs ----
        bqkv = c_ref[l, 0:N, 0:3 * D]          # q-part already scaled by 1/sqrt(d_k)
        bf1 = c_ref[l, N:2 * N, 0:F]
        bo = c_ref[l, 2 * N:3 * N, 0:D]
        bf2 = c_ref[l, 3 * N:4 * N, 0:D]
        g1 = c_ref[l, 4 * N:5 * N, 0:D]
        be1 = c_ref[l, 5 * N:6 * N, 0:D]
        g2 = c_ref[l, 6 * N:7 * N, 0:D]
        be2 = c_ref[l, 7 * N:8 * N, 0:D]

        wqkvT = w_ref[l, 0:D, 0:3 * D]                              # [D, 3D]
        w1T = w_ref[l, D:2 * D, 0:F]                                # [D, F]
        w2T = w_ref[l, 2 * D:2 * D + F, 0:D]                        # [F, D]
        # woT lives at rows [2D+F : 2D+F+D), sliced per head below

        # ---- self-attention sublayer (pre-norm + residual) ----
        xn = _layer_norm(x, g1, be1)
        # fused QKV projection: one [N, D] @ [D, 3D] matmul (scale folded in)
        qkv = jnp.dot(xn, wqkvT, preferred_element_type=jnp.float32) + bqkv

        # per-head attention with the head-merge folded into Wo accumulation
        # (no [H*B, S, dk] gather and no lane concat; v7x accumulates in MRB)
        attn_out = bo                                               # [N, D] accumulator
        for h in range(H):
            qh = qkv[:, h * DK:(h + 1) * DK].reshape(B, S, DK)
            kh = qkv[:, D + h * DK:D + (h + 1) * DK].reshape(B, S, DK)
            vh = qkv[:, 2 * D + h * DK:2 * D + (h + 1) * DK].reshape(B, S, DK)

            s = jnp.einsum('bqd,bkd->bqk', qh, kh,
                           preferred_element_type=jnp.float32)      # [B, S, S]
            s = s - jnp.max(s, axis=-1, keepdims=True)
            e = jnp.exp(s)
            p = e * pl.reciprocal(jnp.sum(e, axis=-1, keepdims=True))
            ctx = jnp.einsum('bqk,bkd->bqd', p, vh,
                             preferred_element_type=jnp.float32).reshape(N, DK)

            woT_h = w_ref[l, 2 * D + F + h * DK:2 * D + F + (h + 1) * DK, 0:D]
            attn_out = attn_out + jnp.dot(ctx, woT_h,
                                          preferred_element_type=jnp.float32)
        x = x + attn_out                                            # dropout = identity

        # ---- feed-forward sublayer (pre-norm + residual) ----
        xn2 = _layer_norm(x, g2, be2)
        h1 = jnp.maximum(
            jnp.dot(xn2, w1T, preferred_element_type=jnp.float32) + bf1, 0.0)
        x = x + jnp.dot(h1, w2T, preferred_element_type=jnp.float32) + bf2

    # ---- classifier epilogue: mean over sequence, then [B, D] @ [D, C] ----
    pooled = jnp.sum(x.reshape(B, S, D), axis=1) * (1.0 / S)        # [B, D]
    wcT = m_ref[N:N + D, :]                      # [D, 32]; cols >= C are zero
    bc = m_ref[N + D:N + D + B, :]               # [B, 32]; cols >= C are zero
    logits = jnp.dot(pooled, wcT, preferred_element_type=jnp.float32) + bc
    o_ref[...] = logits[:, :NUM_CLASSES]


# ---------------------------------------------------------------------------
# Wrapper: one gridless pallas_call, whole slabs resident in VMEM
# ---------------------------------------------------------------------------
@jax.jit
def sentiment_transformer(x, packed):
    B, S, D = x.shape
    x2d = x.reshape(B * S, D)                    # free relabel in the wrapper
    return pl.pallas_call(
        fused_forward_kernel,
        out_shape=jax.ShapeDtypeStruct((B, NUM_CLASSES), jnp.float32),
    )(x2d, packed['wslab'], packed['cslab'], packed['mslab'])


# ---------------------------------------------------------------------------
# One-time weight packing (transpose / concat / scale-fold / pre-broadcast)
# -- all of this is OFF the hot path.
# ---------------------------------------------------------------------------
def pack_params(params):
    L, D, F, H, DK = NUM_LAYERS, D_MODEL, D_FF, NUM_HEADS, D_K
    N = BATCH * SEQ
    scale = 1.0 / math.sqrt(DK)
    layers = params['layers']

    # weight slab: [L, 160, 96]   rows 0:32 wqkvT | 32:64 w1T | 64:128 w2T | 128:160 woT
    wslab = np.zeros((L, 2 * D + F + D, 3 * D), np.float32)
    # constant slab: [L, 128, 96] 8 blocks of N=16 rows each (see kernel slices)
    cslab = np.zeros((L, 8 * N, 3 * D), np.float32)
    for l, p in enumerate(layers):
        wqT = np.asarray(p['wq']).T * scale          # fold 1/sqrt(d_k) into Q
        wqkvT = np.concatenate(
            [wqT, np.asarray(p['wk']).T, np.asarray(p['wv']).T], axis=1)
        wslab[l, 0:D, 0:3 * D] = wqkvT
        wslab[l, D:2 * D, 0:F] = np.asarray(p['w1']).T
        wslab[l, 2 * D:2 * D + F, 0:D] = np.asarray(p['w2']).T
        wslab[l, 2 * D + F:2 * D + F + D, 0:D] = np.asarray(p['wo']).T

        bqkv = np.concatenate([np.asarray(p['bq']) * scale,
                               np.asarray(p['bk']), np.asarray(p['bv'])], axis=1)
        cslab[l, 0:N, 0:3 * D] = np.broadcast_to(bqkv, (N, 3 * D))
        cslab[l, N:2 * N, 0:F] = np.broadcast_to(np.asarray(p['bf1']), (N, F))
        cslab[l, 2 * N:3 * N, 0:D] = np.broadcast_to(np.asarray(p['bo']), (N, D))
        cslab[l, 3 * N:4 * N, 0:D] = np.broadcast_to(np.asarray(p['bf2']), (N, D))
        cslab[l, 4 * N:5 * N, 0:D] = np.broadcast_to(np.asarray(p['g1']), (N, D))
        cslab[l, 5 * N:6 * N, 0:D] = np.broadcast_to(np.asarray(p['be1']), (N, D))
        cslab[l, 6 * N:7 * N, 0:D] = np.broadcast_to(np.asarray(p['g2']), (N, D))
        cslab[l, 7 * N:8 * N, 0:D] = np.broadcast_to(np.asarray(p['be2']), (N, D))

    # misc slab: [56, 32]  rows 0:16 pe (tiled over batch) | 16:48 wcT | 48:50 bc
    mslab = np.zeros((N + D + 8, D), np.float32)
    pe = np.asarray(params['pe'])[:SEQ]                      # pre-slice to SEQ rows
    mslab[0:N, :] = np.tile(pe, (BATCH, 1))
    mslab[N:N + D, 0:NUM_CLASSES] = np.asarray(params['wc']).T
    mslab[N + D:N + D + BATCH, 0:NUM_CLASSES] = np.broadcast_to(
        np.asarray(params['bc']), (BATCH, NUM_CLASSES))

    return dict(wslab=jnp.asarray(wslab),
                cslab=jnp.asarray(cslab),
                mslab=jnp.asarray(mslab))


# ---------------------------------------------------------------------------
# Deterministic parameter init (shapes from the PyTorch __init__)
# ---------------------------------------------------------------------------
def init_params(key):
    def xavier(k, out_f, in_f):
        bound = math.sqrt(6.0 / (in_f + out_f))
        return jax.random.uniform(k, (out_f, in_f), jnp.float32, -bound, bound)

    def bias(k, in_f, n):
        bound = 1.0 / math.sqrt(in_f)
        return jax.random.uniform(k, (1, n), jnp.float32, -bound, bound)

    layers = []
    for _ in range(NUM_LAYERS):
        key, *ks = jax.random.split(key, 13)
        layers.append(dict(
            wq=xavier(ks[0], D_MODEL, D_MODEL), bq=bias(ks[1], D_MODEL, D_MODEL),
            wk=xavier(ks[2], D_MODEL, D_MODEL), bk=bias(ks[3], D_MODEL, D_MODEL),
            wv=xavier(ks[4], D_MODEL, D_MODEL), bv=bias(ks[5], D_MODEL, D_MODEL),
            wo=xavier(ks[6], D_MODEL, D_MODEL), bo=bias(ks[7], D_MODEL, D_MODEL),
            w1=xavier(ks[8], D_FF, D_MODEL),    bf1=bias(ks[9], D_MODEL, D_FF),
            w2=xavier(ks[10], D_MODEL, D_FF),   bf2=bias(ks[11], D_FF, D_MODEL),
            g1=jnp.ones((1, D_MODEL), jnp.float32),
            be1=jnp.zeros((1, D_MODEL), jnp.float32),
            g2=jnp.ones((1, D_MODEL), jnp.float32),
            be2=jnp.zeros((1, D_MODEL), jnp.float32),
        ))
    key, kc, kcb = jax.random.split(key, 3)
    wc = xavier(kc, NUM_CLASSES, D_MODEL)
    bc = bias(kcb, D_MODEL, NUM_CLASSES)

    # sinusoidal positional encoding buffer
    position = jnp.arange(MAX_LEN, dtype=jnp.float32)[:, None]
    div_term = jnp.exp(-jnp.arange(0, D_MODEL, 2, dtype=jnp.float32)
                       * (math.log(10000.0) / D_MODEL))
    pe = jnp.zeros((MAX_LEN, D_MODEL), jnp.float32)
    pe = pe.at[:, 0::2].set(jnp.sin(position * div_term))
    pe = pe.at[:, 1::2].set(jnp.cos(position * div_term))

    return dict(layers=layers, wc=wc, bc=bc, pe=pe)


# ---------------------------------------------------------------------------
# Pure-JAX reference (mirrors the PyTorch module, which is pre-norm) -- check
# ---------------------------------------------------------------------------
def _ref_mha(xn, p):
    B, S, D = xn.shape
    q = xn @ p['wq'].T + p['bq'][0]
    k = xn @ p['wk'].T + p['bk'][0]
    v = xn @ p['wv'].T + p['bv'][0]

    def split(t):
        return t.reshape(B, S, NUM_HEADS, D_K).transpose(0, 2, 1, 3)
    q, k, v = split(q), split(k), split(v)
    scores = q @ k.transpose(0, 1, 3, 2) / math.sqrt(D_K)
    attn = jax.nn.softmax(scores, axis=-1)
    out = (attn @ v).transpose(0, 2, 1, 3).reshape(B, S, D)
    return out @ p['wo'].T + p['bo'][0]


def _ref_ln(x, g, b):
    m = jnp.mean(x, axis=-1, keepdims=True)
    v = jnp.mean((x - m) ** 2, axis=-1, keepdims=True)
    return (x - m) / jnp.sqrt(v + EPS) * g[0] + b[0]


def reference_forward(x, params):
    x = x + params['pe'][None, :x.shape[1], :]
    for p in params['layers']:
        xn = _ref_ln(x, p['g1'], p['be1'])
        x = x + _ref_mha(xn, p)
        xn = _ref_ln(x, p['g2'], p['be2'])
        h = jnp.maximum(xn @ p['w1'].T + p['bf1'][0], 0.0)
        x = x + h @ p['w2'].T + p['bf2'][0]
    pooled = x.mean(axis=1)
    return pooled @ params['wc'].T + params['bc'][0]


# ---------------------------------------------------------------------------
if __name__ == "__main__":
    key = jax.random.PRNGKey(0)
    key, pkey, xkey = jax.random.split(key, 3)
    params = init_params(pkey)
    packed = pack_params(params)             # one-time weight prep (off hot path)
    x = jax.random.normal(xkey, (BATCH, SEQ, D_MODEL), jnp.float32)

    logits = jax.block_until_ready(sentiment_transformer(x, packed))
    assert logits.shape == (BATCH, NUM_CLASSES)
    assert logits.dtype == jnp.float32

    with jax.default_matmul_precision("float32"):
        ref = jax.block_until_ready(reference_forward(x, params))
    np.testing.assert_allclose(np.asarray(logits), np.asarray(ref),
                               rtol=1e-2, atol=1e-2)
    print("KERNEL_OK")
</pallas_src>

<mosaic_0001>
module attributes {stable_mosaic.version = 11 : i64} {
  func.func @fused_forward_kernel(%arg0: memref<16x32xf32, #tpu.memory_space<vmem>>, %arg1: memref<2x160x96xf32, #tpu.memory_space<vmem>>, %arg2: memref<2x128x96xf32, #tpu.memory_space<vmem>>, %arg3: memref<56x32xf32, #tpu.memory_space<vmem>>, %arg4: memref<2x3xf32, #tpu.memory_space<vmem>>) attributes {dimension_semantics = [], scalar_prefetch = 0 : i64, scratch_operands = 0 : i64, tpu.core_type = #tpu.core_type<tc>} {
    %c0 = arith.constant 0 : index
    %c0_0 = arith.constant 0 : index
    %0 = vector.load %arg0[%c0, %c0_0] : memref<16x32xf32, #tpu.memory_space<vmem>>, vector<16x32xf32>
    %c0_1 = arith.constant 0 : index
    %c0_2 = arith.constant 0 : index
    %1 = vector.load %arg3[%c0_1, %c0_2] : memref<56x32xf32, #tpu.memory_space<vmem>>, vector<16x32xf32>
    %2 = arith.addf %0, %1 : vector<16x32xf32>
    %c0_3 = arith.constant 0 : index
    %c0_4 = arith.constant 0 : index
    %c0_5 = arith.constant 0 : index
    %3 = vector.load %arg2[%c0_3, %c0_4, %c0_5] : memref<2x128x96xf32, #tpu.memory_space<vmem>>, vector<1x16x96xf32>
    %4 = vector.shape_cast %3 : vector<1x16x96xf32> to vector<16x96xf32>
    %c0_6 = arith.constant 0 : index
    %c16 = arith.constant 16 : index
    %c0_7 = arith.constant 0 : index
    %5 = vector.load %arg2[%c0_6, %c16, %c0_7] : memref<2x128x96xf32, #tpu.memory_space<vmem>>, vector<1x16x64xf32>
    %6 = vector.shape_cast %5 : vector<1x16x64xf32> to vector<16x64xf32>
    %c0_8 = arith.constant 0 : index
    %c32 = arith.constant 32 : index
    %c0_9 = arith.constant 0 : index
    %7 = vector.load %arg2[%c0_8, %c32, %c0_9] : memref<2x128x96xf32, #tpu.memory_space<vmem>>, vector<1x16x32xf32>
    %8 = vector.shape_cast %7 : vector<1x16x32xf32> to vector<16x32xf32>
    %c0_10 = arith.constant 0 : index
    %c48 = arith.constant 48 : index
    %c0_11 = arith.constant 0 : index
    %9 = vector.load %arg2[%c0_10, %c48, %c0_11] : memref<2x128x96xf32, #tpu.memory_space<vmem>>, vector<1x16x32xf32>
    %10 = vector.shape_cast %9 : vector<1x16x32xf32> to vector<16x32xf32>
    %c0_12 = arith.constant 0 : index
    %c64 = arith.constant 64 : index
    %c0_13 = arith.constant 0 : index
    %11 = vector.load %arg2[%c0_12, %c64, %c0_13] : memref<2x128x96xf32, #tpu.memory_space<vmem>>, vector<1x16x32xf32>
    %12 = vector.shape_cast %11 : vector<1x16x32xf32> to vector<16x32xf32>
    %c0_14 = arith.constant 0 : index
    %c80 = arith.constant 80 : index
    %c0_15 = arith.constant 0 : index
    %13 = vector.load %arg2[%c0_14, %c80, %c0_15] : memref<2x128x96xf32, #tpu.memory_space<vmem>>, vector<1x16x32xf32>
    %14 = vector.shape_cast %13 : vector<1x16x32xf32> to vector<16x32xf32>
    %c0_16 = arith.constant 0 : index
    %c96 = arith.constant 96 : index
    %c0_17 = arith.constant 0 : index
    %15 = vector.load %arg2[%c0_16, %c96, %c0_17] : memref<2x128x96xf32, #tpu.memory_space<vmem>>, vector<1x16x32xf32>
    %16 = vector.shape_cast %15 : vector<1x16x32xf32> to vector<16x32xf32>
    %c0_18 = arith.constant 0 : index
    %c112 = arith.constant 112 : index
    %c0_19 = arith.constant 0 : index
    %17 = vector.load %arg2[%c0_18, %c112, %c0_19] : memref<2x128x96xf32, #tpu.memory_space<vmem>>, vector<1x16x32xf32>
    %18 = vector.shape_cast %17 : vector<1x16x32xf32> to vector<16x32xf32>
    %c0_20 = arith.constant 0 : index
    %c0_21 = arith.constant 0 : index
    %c0_22 = arith.constant 0 : index
    %19 = vector.load %arg1[%c0_20, %c0_21, %c0_22] : memref<2x160x96xf32, #tpu.memory_space<vmem>>, vector<1x32x96xf32>
    %20 = vector.shape_cast %19 : vector<1x32x96xf32> to vector<32x96xf32>
    %c0_23 = arith.constant 0 : index
    %c32_24 = arith.constant 32 : index
    %c0_25 = arith.constant 0 : index
    %21 = vector.load %arg1[%c0_23, %c32_24, %c0_25] : memref<2x160x96xf32, #tpu.memory_space<vmem>>, vector<1x32x64xf32>
    %22 = vector.shape_cast %21 : vector<1x32x64xf32> to vector<32x64xf32>
    %c0_26 = arith.constant 0 : index
    %c64_27 = arith.constant 64 : index
    %c0_28 = arith.constant 0 : index
    %23 = vector.load %arg1[%c0_26, %c64_27, %c0_28] : memref<2x160x96xf32, #tpu.memory_space<vmem>>, vector<1x64x32xf32>
    %24 = vector.shape_cast %23 : vector<1x64x32xf32> to vector<64x32xf32>
    %cst = arith.constant dense<0.000000e+00> : vector<16xf32>
    %25 = vector.multi_reduction <add>, %2, %cst [1] : vector<16x32xf32> to vector<16xf32>
    %26 = vector.shape_cast %25 : vector<16xf32> to vector<16x1xf32>
    %cst_29 = arith.constant 3.200000e+01 : f32
    %27 = vector.broadcast %cst_29 : f32 to vector<16x1xf32>
    %28 = arith.divf %26, %27 : vector<16x1xf32>
    %29 = vector.broadcast %28 : vector<16x1xf32> to vector<16x32xf32>
    %30 = arith.subf %2, %29 : vector<16x32xf32>
    %31 = arith.mulf %30, %30 : vector<16x32xf32>
    %cst_30 = arith.constant dense<0.000000e+00> : vector<16xf32>
    %32 = vector.multi_reduction <add>, %31, %cst_30 [1] : vector<16x32xf32> to vector<16xf32>
    %33 = vector.shape_cast %32 : vector<16xf32> to vector<16x1xf32>
    %cst_31 = arith.constant 3.200000e+01 : f32
    %34 = vector.broadcast %cst_31 : f32 to vector<16x1xf32>
    %35 = arith.divf %33, %34 : vector<16x1xf32>
    %36 = vector.broadcast %28 : vector<16x1xf32> to vector<16x32xf32>
    %37 = arith.subf %2, %36 : vector<16x32xf32>
    %cst_32 = arith.constant 9.99999974E-6 : f32
    %38 = vector.broadcast %cst_32 : f32 to vector<16x1xf32>
    %39 = arith.addf %35, %38 : vector<16x1xf32>
    %40 = math.rsqrt %39 : vector<16x1xf32>
    %41 = vector.broadcast %40 : vector<16x1xf32> to vector<16x32xf32>
    %42 = arith.mulf %37, %41 : vector<16x32xf32>
    %43 = arith.mulf %42, %12 : vector<16x32xf32>
    %44 = arith.addf %43, %14 : vector<16x32xf32>
    %cst_33 = arith.constant dense<0.000000e+00> : vector<16x96xf32>
    %45 = tpu.matmul %44, %20, %cst_33 {dimension_numbers = #tpu.dot_dimension_numbers<[1], [0], [0], [1], [0, 0, 1, 1], [], []>} : vector<16x32xf32>, vector<32x96xf32>, vector<16x96xf32> -> vector<16x96xf32>
    %46 = arith.addf %45, %4 : vector<16x96xf32>
    %47 = vector.extract_strided_slice %46 {offsets = [0, 0], sizes = [16, 8], strides = [1, 1]} : vector<16x96xf32> to vector<16x8xf32>
    %48 = vector.shape_cast %47 : vector<16x8xf32> to vector<2x8x8xf32>
    %49 = vector.extract_strided_slice %46 {offsets = [0, 32], sizes = [16, 8], strides = [1, 1]} : vector<16x96xf32> to vector<16x8xf32>
    %50 = vector.shape_cast %49 : vector<16x8xf32> to vector<2x8x8xf32>
    %51 = vector.extract_strided_slice %46 {offsets = [0, 64], sizes = [16, 8], strides = [1, 1]} : vector<16x96xf32> to vector<16x8xf32>
    %52 = vector.shape_cast %51 : vector<16x8xf32> to vector<2x8x8xf32>
    "tpu.trace_start"() <{level = 10 : i32, message = "bqd,bkd->bqk"}> : () -> ()
    %cst_34 = arith.constant dense<0.000000e+00> : vector<2x8x8xf32>
    %53 = tpu.matmul %48, %50, %cst_34 {dimension_numbers = #tpu.dot_dimension_numbers<[2], [2], [1], [1], [0, 0, 0, 1, 1, 1], [0], [0]>} : vector<2x8x8xf32>, vector<2x8x8xf32>, vector<2x8x8xf32> -> vector<2x8x8xf32>
    "tpu.trace_stop"() : () -> ()
    %cst_35 = arith.constant dense<0xFF800000> : vector<2x8xf32>
    %54 = vector.multi_reduction <maximumf>, %53, %cst_35 [2] : vector<2x8x8xf32> to vector<2x8xf32>
    %55 = vector.shape_cast %54 : vector<2x8xf32> to vector<2x8x1xf32>
    %56 = vector.broadcast %55 : vector<2x8x1xf32> to vector<2x8x8xf32>
    %57 = arith.subf %53, %56 : vector<2x8x8xf32>
    %58 = math.exp %57 : vector<2x8x8xf32>
    %cst_36 = arith.constant dense<0.000000e+00> : vector<2x8xf32>
    %59 = vector.multi_reduction <add>, %58, %cst_36 [2] : vector<2x8x8xf32> to vector<2x8xf32>
    %60 = vector.shape_cast %59 : vector<2x8xf32> to vector<2x8x1xf32>
    %61 = tpu.reciprocal %60 : vector<2x8x1xf32> -> vector<2x8x1xf32>
    %62 = vector.broadcast %61 : vector<2x8x1xf32> to vector<2x8x8xf32>
    %63 = arith.mulf %58, %62 : vector<2x8x8xf32>
    "tpu.trace_start"() <{level = 10 : i32, message = "bqk,bkd->bqd"}> : () -> ()
    %cst_37 = arith.constant dense<0.000000e+00> : vector<2x8x8xf32>
    %64 = tpu.matmul %63, %52, %cst_37 {dimension_numbers = #tpu.dot_dimension_numbers<[2], [1], [1], [2], [0, 0, 0, 1, 1, 2], [0], [0]>} : vector<2x8x8xf32>, vector<2x8x8xf32>, vector<2x8x8xf32> -> vector<2x8x8xf32>
    "tpu.trace_stop"() : () -> ()
    %65 = vector.shape_cast %64 : vector<2x8x8xf32> to vector<16x8xf32>
    %c0_38 = arith.constant 0 : index
    %c128 = arith.constant 128 : index
    %c0_39 = arith.constant 0 : index
    %66 = vector.load %arg1[%c0_38, %c128, %c0_39] : memref<2x160x96xf32, #tpu.memory_space<vmem>>, vector<1x8x32xf32>
    %67 = vector.shape_cast %66 : vector<1x8x32xf32> to vector<8x32xf32>
    %cst_40 = arith.constant dense<0.000000e+00> : vector<16x32xf32>
    %68 = tpu.matmul %65, %67, %cst_40 {dimension_numbers = #tpu.dot_dimension_numbers<[1], [0], [0], [1], [0, 0, 1, 1], [], []>} : vector<16x8xf32>, vector<8x32xf32>, vector<16x32xf32> -> vector<16x32xf32>
    %69 = arith.addf %8, %68 : vector<16x32xf32>
    %70 = vector.extract_strided_slice %46 {offsets = [0, 8], sizes = [16, 8], strides = [1, 1]} : vector<16x96xf32> to vector<16x8xf32>
    %71 = vector.shape_cast %70 : vector<16x8xf32> to vector<2x8x8xf32>
    %72 = vector.extract_strided_slice %46 {offsets = [0, 40], sizes = [16, 8], strides = [1, 1]} : vector<16x96xf32> to vector<16x8xf32>
    %73 = vector.shape_cast %72 : vector<16x8xf32> to vector<2x8x8xf32>
    %74 = vector.extract_strided_slice %46 {offsets = [0, 72], sizes = [16, 8], strides = [1, 1]} : vector<16x96xf32> to vector<16x8xf32>
    %75 = vector.shape_cast %74 : vector<16x8xf32> to vector<2x8x8xf32>
    "tpu.trace_start"() <{level = 10 : i32, message = "bqd,bkd->bqk"}> : () -> ()
    %cst_41 = arith.constant dense<0.000000e+00> : vector<2x8x8xf32>
    %76 = tpu.matmul %71, %73, %cst_41 {dimension_numbers = #tpu.dot_dimension_numbers<[2], [2], [1], [1], [0, 0, 0, 1, 1, 1], [0], [0]>} : vector<2x8x8xf32>, vector<2x8x8xf32>, vector<2x8x8xf32> -> vector<2x8x8xf32>
    "tpu.trace_stop"() : () -> ()
    %cst_42 = arith.constant dense<0xFF800000> : vector<2x8xf32>
    %77 = vector.multi_reduction <maximumf>, %76, %cst_42 [2] : vector<2x8x8xf32> to vector<2x8xf32>
    %78 = vector.shape_cast %77 : vector<2x8xf32> to vector<2x8x1xf32>
    %79 = vector.broadcast %78 : vector<2x8x1xf32> to vector<2x8x8xf32>
    %80 = arith.subf %76, %79 : vector<2x8x8xf32>
    %81 = math.exp %80 : vector<2x8x8xf32>
    %cst_43 = arith.constant dense<0.000000e+00> : vector<2x8xf32>
    %82 = vector.multi_reduction <add>, %81, %cst_43 [2] : vector<2x8x8xf32> to vector<2x8xf32>
    %83 = vector.shape_cast %82 : vector<2x8xf32> to vector<2x8x1xf32>
    %84 = tpu.reciprocal %83 : vector<2x8x1xf32> -> vector<2x8x1xf32>
    %85 = vector.broadcast %84 : vector<2x8x1xf32> to vector<2x8x8xf32>
    %86 = arith.mulf %81, %85 : vector<2x8x8xf32>
    "tpu.trace_start"() <{level = 10 : i32, message = "bqk,bkd->bqd"}> : () -> ()
    %cst_44 = arith.constant dense<0.000000e+00> : vector<2x8x8xf32>
    %87 = tpu.matmul %86, %75, %cst_44 {dimension_numbers = #tpu.dot_dimension_numbers<[2], [1], [1], [2], [0, 0, 0, 1, 1, 2], [0], [0]>} : vector<2x8x8xf32>, vector<2x8x8xf32>, vector<2x8x8xf32> -> vector<2x8x8xf32>
    "tpu.trace_stop"() : () -> ()
    %88 = vector.shape_cast %87 : vector<2x8x8xf32> to vector<16x8xf32>
    %c0_45 = arith.constant 0 : index
    %c136 = arith.constant 136 : index
    %c0_46 = arith.constant 0 : index
    %89 = vector.load %arg1[%c0_45, %c136, %c0_46] : memref<2x160x96xf32, #tpu.memory_space<vmem>>, vector<1x8x32xf32>
    %90 = vector.shape_cast %89 : vector<1x8x32xf32> to vector<8x32xf32>
    %cst_47 = arith.constant dense<0.000000e+00> : vector<16x32xf32>
    %91 = tpu.matmul %88, %90, %cst_47 {dimension_numbers = #tpu.dot_dimension_numbers<[1], [0], [0], [1], [0, 0, 1, 1], [], []>} : vector<16x8xf32>, vector<8x32xf32>, vector<16x32xf32> -> vector<16x32xf32>
    %92 = arith.addf %69, %91 : vector<16x32xf32>
    %93 = vector.extract_strided_slice %46 {offsets = [0, 16], sizes = [16, 8], strides = [1, 1]} : vector<16x96xf32> to vector<16x8xf32>
    %94 = vector.shape_cast %93 : vector<16x8xf32> to vector<2x8x8xf32>
    %95 = vector.extract_strided_slice %46 {offsets = [0, 48], sizes = [16, 8], strides = [1, 1]} : vector<16x96xf32> to vector<16x8xf32>
    %96 = vector.shape_cast %95 : vector<16x8xf32> to vector<2x8x8xf32>
    %97 = vector.extract_strided_slice %46 {offsets = [0, 80], sizes = [16, 8], strides = [1, 1]} : vector<16x96xf32> to vector<16x8xf32>
    %98 = vector.shape_cast %97 : vector<16x8xf32> to vector<2x8x8xf32>
    "tpu.trace_start"() <{level = 10 : i32, message = "bqd,bkd->bqk"}> : () -> ()
    %cst_48 = arith.constant dense<0.000000e+00> : vector<2x8x8xf32>
    %99 = tpu.matmul %94, %96, %cst_48 {dimension_numbers = #tpu.dot_dimension_numbers<[2], [2], [1], [1], [0, 0, 0, 1, 1, 1], [0], [0]>} : vector<2x8x8xf32>, vector<2x8x8xf32>, vector<2x8x8xf32> -> vector<2x8x8xf32>
    "tpu.trace_stop"() : () -> ()
    %cst_49 = arith.constant dense<0xFF800000> : vector<2x8xf32>
    %100 = vector.multi_reduction <maximumf>, %99, %cst_49 [2] : vector<2x8x8xf32> to vector<2x8xf32>
    %101 = vector.shape_cast %100 : vector<2x8xf32> to vector<2x8x1xf32>
    %102 = vector.broadcast %101 : vector<2x8x1xf32> to vector<2x8x8xf32>
    %103 = arith.subf %99, %102 : vector<2x8x8xf32>
    %104 = math.exp %103 : vector<2x8x8xf32>
    %cst_50 = arith.constant dense<0.000000e+00> : vector<2x8xf32>
    %105 = vector.multi_reduction <add>, %104, %cst_50 [2] : vector<2x8x8xf32> to vector<2x8xf32>
    %106 = vector.shape_cast %105 : vector<2x8xf32> to vector<2x8x1xf32>
    %107 = tpu.reciprocal %106 : vector<2x8x1xf32> -> vector<2x8x1xf32>
    %108 = vector.broadcast %107 : vector<2x8x1xf32> to vector<2x8x8xf32>
    %109 = arith.mulf %104, %108 : vector<2x8x8xf32>
    "tpu.trace_start"() <{level = 10 : i32, message = "bqk,bkd->bqd"}> : () -> ()
    %cst_51 = arith.constant dense<0.000000e+00> : vector<2x8x8xf32>
    %110 = tpu.matmul %109, %98, %cst_51 {dimension_numbers = #tpu.dot_dimension_numbers<[2], [1], [1], [2], [0, 0, 0, 1, 1, 2], [0], [0]>} : vector<2x8x8xf32>, vector<2x8x8xf32>, vector<2x8x8xf32> -> vector<2x8x8xf32>
    "tpu.trace_stop"() : () -> ()
    %111 = vector.shape_cast %110 : vector<2x8x8xf32> to vector<16x8xf32>
    %c0_52 = arith.constant 0 : index
    %c144 = arith.constant 144 : index
    %c0_53 = arith.constant 0 : index
    %112 = vector.load %arg1[%c0_52, %c144, %c0_53] : memref<2x160x96xf32, #tpu.memory_space<vmem>>, vector<1x8x32xf32>
    %113 = vector.shape_cast %112 : vector<1x8x32xf32> to vector<8x32xf32>
    %cst_54 = arith.constant dense<0.000000e+00> : vector<16x32xf32>
    %114 = tpu.matmul %111, %113, %cst_54 {dimension_numbers = #tpu.dot_dimension_numbers<[1], [0], [0], [1], [0, 0, 1, 1], [], []>} : vector<16x8xf32>, vector<8x32xf32>, vector<16x32xf32> -> vector<16x32xf32>
    %115 = arith.addf %92, %114 : vector<16x32xf32>
    %116 = vector.extract_strided_slice %46 {offsets = [0, 24], sizes = [16, 8], strides = [1, 1]} : vector<16x96xf32> to vector<16x8xf32>
    %117 = vector.shape_cast %116 : vector<16x8xf32> to vector<2x8x8xf32>
    %118 = vector.extract_strided_slice %46 {offsets = [0, 56], sizes = [16, 8], strides = [1, 1]} : vector<16x96xf32> to vector<16x8xf32>
    %119 = vector.shape_cast %118 : vector<16x8xf32> to vector<2x8x8xf32>
    %120 = vector.extract_strided_slice %46 {offsets = [0, 88], sizes = [16, 8], strides = [1, 1]} : vector<16x96xf32> to vector<16x8xf32>
    %121 = vector.shape_cast %120 : vector<16x8xf32> to vector<2x8x8xf32>
    "tpu.trace_start"() <{level = 10 : i32, message = "bqd,bkd->bqk"}> : () -> ()
    %cst_55 = arith.constant dense<0.000000e+00> : vector<2x8x8xf32>
    %122 = tpu.matmul %117, %119, %cst_55 {dimension_numbers = #tpu.dot_dimension_numbers<[2], [2], [1], [1], [0, 0, 0, 1, 1, 1], [0], [0]>} : vector<2x8x8xf32>, vector<2x8x8xf32>, vector<2x8x8xf32> -> vector<2x8x8xf32>
    "tpu.trace_stop"() : () -> ()
    %cst_56 = arith.constant dense<0xFF800000> : vector<2x8xf32>
    %123 = vector.multi_reduction <maximumf>, %122, %cst_56 [2] : vector<2x8x8xf32> to vector<2x8xf32>
    %124 = vector.shape_cast %123 : vector<2x8xf32> to vector<2x8x1xf32>
    %125 = vector.broadcast %124 : vector<2x8x1xf32> to vector<2x8x8xf32>
    %126 = arith.subf %122, %125 : vector<2x8x8xf32>
    %127 = math.exp %126 : vector<2x8x8xf32>
    %cst_57 = arith.constant dense<0.000000e+00> : vector<2x8xf32>
    %128 = vector.multi_reduction <add>, %127, %cst_57 [2] : vector<2x8x8xf32> to vector<2x8xf32>
    %129 = vector.shape_cast %128 : vector<2x8xf32> to vector<2x8x1xf32>
    %130 = tpu.reciprocal %129 : vector<2x8x1xf32> -> vector<2x8x1xf32>
    %131 = vector.broadcast %130 : vector<2x8x1xf32> to vector<2x8x8xf32>
    %132 = arith.mulf %127, %131 : vector<2x8x8xf32>
    "tpu.trace_start"() <{level = 10 : i32, message = "bqk,bkd->bqd"}> : () -> ()
    %cst_58 = arith.constant dense<0.000000e+00> : vector<2x8x8xf32>
    %133 = tpu.matmul %132, %121, %cst_58 {dimension_numbers = #tpu.dot_dimension_numbers<[2], [1], [1], [2], [0, 0, 0, 1, 1, 2], [0], [0]>} : vector<2x8x8xf32>, vector<2x8x8xf32>, vector<2x8x8xf32> -> vector<2x8x8xf32>
    "tpu.trace_stop"() : () -> ()
    %134 = vector.shape_cast %133 : vector<2x8x8xf32> to vector<16x8xf32>
    %c0_59 = arith.constant 0 : index
    %c152 = arith.constant 152 : index
    %c0_60 = arith.constant 0 : index
    %135 = vector.load %arg1[%c0_59, %c152, %c0_60] : memref<2x160x96xf32, #tpu.memory_space<vmem>>, vector<1x8x32xf32>
    %136 = vector.shape_cast %135 : vector<1x8x32xf32> to vector<8x32xf32>
    %cst_61 = arith.constant dense<0.000000e+00> : vector<16x32xf32>
    %137 = tpu.matmul %134, %136, %cst_61 {dimension_numbers = #tpu.dot_dimension_numbers<[1], [0], [0], [1], [0, 0, 1, 1], [], []>} : vector<16x8xf32>, vector<8x32xf32>, vector<16x32xf32> -> vector<16x32xf32>
    %138 = arith.addf %115, %137 : vector<16x32xf32>
    %139 = arith.addf %2, %138 : vector<16x32xf32>
    %cst_62 = arith.constant dense<0.000000e+00> : vector<16xf32>
    %140 = vector.multi_reduction <add>, %139, %cst_62 [1] : vector<16x32xf32> to vector<16xf32>
    %141 = vector.shape_cast %140 : vector<16xf32> to vector<16x1xf32>
    %cst_63 = arith.constant 3.200000e+01 : f32
    %142 = vector.broadcast %cst_63 : f32 to vector<16x1xf32>
    %143 = arith.divf %141, %142 : vector<16x1xf32>
    %144 = vector.broadcast %143 : vector<16x1xf32> to vector<16x32xf32>
    %145 = arith.subf %139, %144 : vector<16x32xf32>
    %146 = arith.mulf %145, %145 : vector<16x32xf32>
    %cst_64 = arith.constant dense<0.000000e+00> : vector<16xf32>
    %147 = vector.multi_reduction <add>, %146, %cst_64 [1] : vector<16x32xf32> to vector<16xf32>
    %148 = vector.shape_cast %147 : vector<16xf32> to vector<16x1xf32>
    %cst_65 = arith.constant 3.200000e+01 : f32
    %149 = vector.broadcast %cst_65 : f32 to vector<16x1xf32>
    %150 = arith.divf %148, %149 : vector<16x1xf32>
    %151 = vector.broadcast %143 : vector<16x1xf32> to vector<16x32xf32>
    %152 = arith.subf %139, %151 : vector<16x32xf32>
    %cst_66 = arith.constant 9.99999974E-6 : f32
    %153 = vector.broadcast %cst_66 : f32 to vector<16x1xf32>
    %154 = arith.addf %150, %153 : vector<16x1xf32>
    %155 = math.rsqrt %154 : vector<16x1xf32>
    %156 = vector.broadcast %155 : vector<16x1xf32> to vector<16x32xf32>
    %157 = arith.mulf %152, %156 : vector<16x32xf32>
    %158 = arith.mulf %157, %16 : vector<16x32xf32>
    %159 = arith.addf %158, %18 : vector<16x32xf32>
    %cst_67 = arith.constant dense<0.000000e+00> : vector<16x64xf32>
    %160 = tpu.matmul %159, %22, %cst_67 {dimension_numbers = #tpu.dot_dimension_numbers<[1], [0], [0], [1], [0, 0, 1, 1], [], []>} : vector<16x32xf32>, vector<32x64xf32>, vector<16x64xf32> -> vector<16x64xf32>
    %161 = arith.addf %160, %6 : vector<16x64xf32>
    %cst_68 = arith.constant 0.000000e+00 : f32
    %162 = vector.broadcast %cst_68 : f32 to vector<16x64xf32>
    %163 = arith.maximumf %161, %162 : vector<16x64xf32>
    %cst_69 = arith.constant dense<0.000000e+00> : vector<16x32xf32>
    %164 = tpu.matmul %163, %24, %cst_69 {dimension_numbers = #tpu.dot_dimension_numbers<[1], [0], [0], [1], [0, 0, 1, 1], [], []>} : vector<16x64xf32>, vector<64x32xf32>, vector<16x32xf32> -> vector<16x32xf32>
    %165 = arith.addf %139, %164 : vector<16x32xf32>
    %166 = arith.addf %165, %10 : vector<16x32xf32>
    %c1 = arith.constant 1 : index
    %c0_70 = arith.constant 0 : index
    %c0_71 = arith.constant 0 : index
    %167 = vector.load %arg2[%c1, %c0_70, %c0_71] : memref<2x128x96xf32, #tpu.memory_space<vmem>>, vector<1x16x96xf32>
    %168 = vector.shape_cast %167 : vector<1x16x96xf32> to vector<16x96xf32>
    %c1_72 = arith.constant 1 : index
    %c16_73 = arith.constant 16 : index
    %c0_74 = arith.constant 0 : index
    %169 = vector.load %arg2[%c1_72, %c16_73, %c0_74] : memref<2x128x96xf32, #tpu.memory_space<vmem>>, vector<1x16x64xf32>
    %170 = vector.shape_cast %169 : vector<1x16x64xf32> to vector<16x64xf32>
    %c1_75 = arith.constant 1 : index
    %c32_76 = arith.constant 32 : index
    %c0_77 = arith.constant 0 : index
    %171 = vector.load %arg2[%c1_75, %c32_76, %c0_77] : memref<2x128x96xf32, #tpu.memory_space<vmem>>, vector<1x16x32xf32>
    %172 = vector.shape_cast %171 : vector<1x16x32xf32> to vector<16x32xf32>
    %c1_78 = arith.constant 1 : index
    %c48_79 = arith.constant 48 : index
    %c0_80 = arith.constant 0 : index
    %173 = vector.load %arg2[%c1_78, %c48_79, %c0_80] : memref<2x128x96xf32, #tpu.memory_space<vmem>>, vector<1x16x32xf32>
    %174 = vector.shape_cast %173 : vector<1x16x32xf32> to vector<16x32xf32>
    %c1_81 = arith.constant 1 : index
    %c64_82 = arith.constant 64 : index
    %c0_83 = arith.constant 0 : index
    %175 = vector.load %arg2[%c1_81, %c64_82, %c0_83] : memref<2x128x96xf32, #tpu.memory_space<vmem>>, vector<1x16x32xf32>
    %176 = vector.shape_cast %175 : vector<1x16x32xf32> to vector<16x32xf32>
    %c1_84 = arith.constant 1 : index
    %c80_85 = arith.constant 80 : index
    %c0_86 = arith.constant 0 : index
    %177 = vector.load %arg2[%c1_84, %c80_85, %c0_86] : memref<2x128x96xf32, #tpu.memory_space<vmem>>, vector<1x16x32xf32>
    %178 = vector.shape_cast %177 : vector<1x16x32xf32> to vector<16x32xf32>
    %c1_87 = arith.constant 1 : index
    %c96_88 = arith.constant 96 : index
    %c0_89 = arith.constant 0 : index
    %179 = vector.load %arg2[%c1_87, %c96_88, %c0_89] : memref<2x128x96xf32, #tpu.memory_space<vmem>>, vector<1x16x32xf32>
    %180 = vector.shape_cast %179 : vector<1x16x32xf32> to vector<16x32xf32>
    %c1_90 = arith.constant 1 : index
    %c112_91 = arith.constant 112 : index
    %c0_92 = arith.constant 0 : index
    %181 = vector.load %arg2[%c1_90, %c112_91, %c0_92] : memref<2x128x96xf32, #tpu.memory_space<vmem>>, vector<1x16x32xf32>
    %182 = vector.shape_cast %181 : vector<1x16x32xf32> to vector<16x32xf32>
    %c1_93 = arith.constant 1 : index
    %c0_94 = arith.constant 0 : index
    %c0_95 = arith.constant 0 : index
    %183 = vector.load %arg1[%c1_93, %c0_94, %c0_95] : memref<2x160x96xf32, #tpu.memory_space<vmem>>, vector<1x32x96xf32>
    %184 = vector.shape_cast %183 : vector<1x32x96xf32> to vector<32x96xf32>
    %c1_96 = arith.constant 1 : index
    %c32_97 = arith.constant 32 : index
    %c0_98 = arith.constant 0 : index
    %185 = vector.load %arg1[%c1_96, %c32_97, %c0_98] : memref<2x160x96xf32, #tpu.memory_space<vmem>>, vector<1x32x64xf32>
    %186 = vector.shape_cast %185 : vector<1x32x64xf32> to vector<32x64xf32>
    %c1_99 = arith.constant 1 : index
    %c64_100 = arith.constant 64 : index
    %c0_101 = arith.constant 0 : index
    %187 = vector.load %arg1[%c1_99, %c64_100, %c0_101] : memref<2x160x96xf32, #tpu.memory_space<vmem>>, vector<1x64x32xf32>
    %188 = vector.shape_cast %187 : vector<1x64x32xf32> to vector<64x32xf32>
    %cst_102 = arith.constant dense<0.000000e+00> : vector<16xf32>
    %189 = vector.multi_reduction <add>, %166, %cst_102 [1] : vector<16x32xf32> to vector<16xf32>
    %190 = vector.shape_cast %189 : vector<16xf32> to vector<16x1xf32>
    %cst_103 = arith.constant 3.200000e+01 : f32
    %191 = vector.broadcast %cst_103 : f32 to vector<16x1xf32>
    %192 = arith.divf %190, %191 : vector<16x1xf32>
    %193 = vector.broadcast %192 : vector<16x1xf32> to vector<16x32xf32>
    %194 = arith.subf %166, %193 : vector<16x32xf32>
    %195 = arith.mulf %194, %194 : vector<16x32xf32>
    %cst_104 = arith.constant dense<0.000000e+00> : vector<16xf32>
    %196 = vector.multi_reduction <add>, %195, %cst_104 [1] : vector<16x32xf32> to vector<16xf32>
    %197 = vector.shape_cast %196 : vector<16xf32> to vector<16x1xf32>
    %cst_105 = arith.constant 3.200000e+01 : f32
    %198 = vector.broadcast %cst_105 : f32 to vector<16x1xf32>
    %199 = arith.divf %197, %198 : vector<16x1xf32>
    %200 = vector.broadcast %192 : vector<16x1xf32> to vector<16x32xf32>
    %201 = arith.subf %166, %200 : vector<16x32xf32>
    %cst_106 = arith.constant 9.99999974E-6 : f32
    %202 = vector.broadcast %cst_106 : f32 to vector<16x1xf32>
    %203 = arith.addf %199, %202 : vector<16x1xf32>
    %204 = math.rsqrt %203 : vector<16x1xf32>
    %205 = vector.broadcast %204 : vector<16x1xf32> to vector<16x32xf32>
    %206 = arith.mulf %201, %205 : vector<16x32xf32>
    %207 = arith.mulf %206, %176 : vector<16x32xf32>
    %208 = arith.addf %207, %178 : vector<16x32xf32>
    %cst_107 = arith.constant dense<0.000000e+00> : vector<16x96xf32>
    %209 = tpu.matmul %208, %184, %cst_107 {dimension_numbers = #tpu.dot_dimension_numbers<[1], [0], [0], [1], [0, 0, 1, 1], [], []>} : vector<16x32xf32>, vector<32x96xf32>, vector<16x96xf32> -> vector<16x96xf32>
    %210 = arith.addf %209, %168 : vector<16x96xf32>
    %211 = vector.extract_strided_slice %210 {offsets = [0, 0], sizes = [16, 8], strides = [1, 1]} : vector<16x96xf32> to vector<16x8xf32>
    %212 = vector.shape_cast %211 : vector<16x8xf32> to vector<2x8x8xf32>
    %213 = vector.extract_strided_slice %210 {offsets = [0, 32], sizes = [16, 8], strides = [1, 1]} : vector<16x96xf32> to vector<16x8xf32>
    %214 = vector.shape_cast %213 : vector<16x8xf32> to vector<2x8x8xf32>
    %215 = vector.extract_strided_slice %210 {offsets = [0, 64], sizes = [16, 8], strides = [1, 1]} : vector<16x96xf32> to vector<16x8xf32>
    %216 = vector.shape_cast %215 : vector<16x8xf32> to vector<2x8x8xf32>
    "tpu.trace_start"() <{level = 10 : i32, message = "bqd,bkd->bqk"}> : () -> ()
    %cst_108 = arith.constant dense<0.000000e+00> : vector<2x8x8xf32>
    %217 = tpu.matmul %212, %214, %cst_108 {dimension_numbers = #tpu.dot_dimension_numbers<[2], [2], [1], [1], [0, 0, 0, 1, 1, 1], [0], [0]>} : vector<2x8x8xf32>, vector<2x8x8xf32>, vector<2x8x8xf32> -> vector<2x8x8xf32>
    "tpu.trace_stop"() : () -> ()
    %cst_109 = arith.constant dense<0xFF800000> : vector<2x8xf32>
    %218 = vector.multi_reduction <maximumf>, %217, %cst_109 [2] : vector<2x8x8xf32> to vector<2x8xf32>
    %219 = vector.shape_cast %218 : vector<2x8xf32> to vector<2x8x1xf32>
    %220 = vector.broadcast %219 : vector<2x8x1xf32> to vector<2x8x8xf32>
    %221 = arith.subf %217, %220 : vector<2x8x8xf32>
    %222 = math.exp %221 : vector<2x8x8xf32>
    %cst_110 = arith.constant dense<0.000000e+00> : vector<2x8xf32>
    %223 = vector.multi_reduction <add>, %222, %cst_110 [2] : vector<2x8x8xf32> to vector<2x8xf32>
    %224 = vector.shape_cast %223 : vector<2x8xf32> to vector<2x8x1xf32>
    %225 = tpu.reciprocal %224 : vector<2x8x1xf32> -> vector<2x8x1xf32>
    %226 = vector.broadcast %225 : vector<2x8x1xf32> to vector<2x8x8xf32>
    %227 = arith.mulf %222, %226 : vector<2x8x8xf32>
    "tpu.trace_start"() <{level = 10 : i32, message = "bqk,bkd->bqd"}> : () -> ()
    %cst_111 = arith.constant dense<0.000000e+00> : vector<2x8x8xf32>
    %228 = tpu.matmul %227, %216, %cst_111 {dimension_numbers = #tpu.dot_dimension_numbers<[2], [1], [1], [2], [0, 0, 0, 1, 1, 2], [0], [0]>} : vector<2x8x8xf32>, vector<2x8x8xf32>, vector<2x8x8xf32> -> vector<2x8x8xf32>
    "tpu.trace_stop"() : () -> ()
    %229 = vector.shape_cast %228 : vector<2x8x8xf32> to vector<16x8xf32>
    %c1_112 = arith.constant 1 : index
    %c128_113 = arith.constant 128 : index
    %c0_114 = arith.constant 0 : index
    %230 = vector.load %arg1[%c1_112, %c128_113, %c0_114] : memref<2x160x96xf32, #tpu.memory_space<vmem>>, vector<1x8x32xf32>
    %231 = vector.shape_cast %230 : vector<1x8x32xf32> to vector<8x32xf32>
    %cst_115 = arith.constant dense<0.000000e+00> : vector<16x32xf32>
    %232 = tpu.matmul %229, %231, %cst_115 {dimension_numbers = #tpu.dot_dimension_numbers<[1], [0], [0], [1], [0, 0, 1, 1], [], []>} : vector<16x8xf32>, vector<8x32xf32>, vector<16x32xf32> -> vector<16x32xf32>
    %233 = arith.addf %172, %232 : vector<16x32xf32>
    %234 = vector.extract_strided_slice %210 {offsets = [0, 8], sizes = [16, 8], strides = [1, 1]} : vector<16x96xf32> to vector<16x8xf32>
    %235 = vector.shape_cast %234 : vector<16x8xf32> to vector<2x8x8xf32>
    %236 = vector.extract_strided_slice %210 {offsets = [0, 40], sizes = [16, 8], strides = [1, 1]} : vector<16x96xf32> to vector<16x8xf32>
    %237 = vector.shape_cast %236 : vector<16x8xf32> to vector<2x8x8xf32>
    %238 = vector.extract_strided_slice %210 {offsets = [0, 72], sizes = [16, 8], strides = [1, 1]} : vector<16x96xf32> to vector<16x8xf32>
    %239 = vector.shape_cast %238 : vector<16x8xf32> to vector<2x8x8xf32>
    "tpu.trace_start"() <{level = 10 : i32, message = "bqd,bkd->bqk"}> : () -> ()
    %cst_116 = arith.constant dense<0.000000e+00> : vector<2x8x8xf32>
    %240 = tpu.matmul %235, %237, %cst_116 {dimension_numbers = #tpu.dot_dimension_numbers<[2], [2], [1], [1], [0, 0, 0, 1, 1, 1], [0], [0]>} : vector<2x8x8xf32>, vector<2x8x8xf32>, vector<2x8x8xf32> -> vector<2x8x8xf32>
    "tpu.trace_stop"() : () -> ()
    %cst_117 = arith.constant dense<0xFF800000> : vector<2x8xf32>
    %241 = vector.multi_reduction <maximumf>, %240, %cst_117 [2] : vector<2x8x8xf32> to vector<2x8xf32>
    %242 = vector.shape_cast %241 : vector<2x8xf32> to vector<2x8x1xf32>
    %243 = vector.broadcast %242 : vector<2x8x1xf32> to vector<2x8x8xf32>
    %244 = arith.subf %240, %243 : vector<2x8x8xf32>
    %245 = math.exp %244 : vector<2x8x8xf32>
    %cst_118 = arith.constant dense<0.000000e+00> : vector<2x8xf32>
    %246 = vector.multi_reduction <add>, %245, %cst_118 [2] : vector<2x8x8xf32> to vector<2x8xf32>
    %247 = vector.shape_cast %246 : vector<2x8xf32> to vector<2x8x1xf32>
    %248 = tpu.reciprocal %247 : vector<2x8x1xf32> -> vector<2x8x1xf32>
    %249 = vector.broadcast %248 : vector<2x8x1xf32> to vector<2x8x8xf32>
    %250 = arith.mulf %245, %249 : vector<2x8x8xf32>
    "tpu.trace_start"() <{level = 10 : i32, message = "bqk,bkd->bqd"}> : () -> ()
    %cst_119 = arith.constant dense<0.000000e+00> : vector<2x8x8xf32>
    %251 = tpu.matmul %250, %239, %cst_119 {dimension_numbers = #tpu.dot_dimension_numbers<[2], [1], [1], [2], [0, 0, 0, 1, 1, 2], [0], [0]>} : vector<2x8x8xf32>, vector<2x8x8xf32>, vector<2x8x8xf32> -> vector<2x8x8xf32>
    "tpu.trace_stop"() : () -> ()
    %252 = vector.shape_cast %251 : vector<2x8x8xf32> to vector<16x8xf32>
    %c1_120 = arith.constant 1 : index
    %c136_121 = arith.constant 136 : index
    %c0_122 = arith.constant 0 : index
    %253 = vector.load %arg1[%c1_120, %c136_121, %c0_122] : memref<2x160x96xf32, #tpu.memory_space<vmem>>, vector<1x8x32xf32>
    %254 = vector.shape_cast %253 : vector<1x8x32xf32> to vector<8x32xf32>
    %cst_123 = arith.constant dense<0.000000e+00> : vector<16x32xf32>
    %255 = tpu.matmul %252, %254, %cst_123 {dimension_numbers = #tpu.dot_dimension_numbers<[1], [0], [0], [1], [0, 0, 1, 1], [], []>} : vector<16x8xf32>, vector<8x32xf32>, vector<16x32xf32> -> vector<16x32xf32>
    %256 = arith.addf %233, %255 : vector<16x32xf32>
    %257 = vector.extract_strided_slice %210 {offsets = [0, 16], sizes = [16, 8], strides = [1, 1]} : vector<16x96xf32> to vector<16x8xf32>
    %258 = vector.shape_cast %257 : vector<16x8xf32> to vector<2x8x8xf32>
    %259 = vector.extract_strided_slice %210 {offsets = [0, 48], sizes = [16, 8], strides = [1, 1]} : vector<16x96xf32> to vector<16x8xf32>
    %260 = vector.shape_cast %259 : vector<16x8xf32> to vector<2x8x8xf32>
    %261 = vector.extract_strided_slice %210 {offsets = [0, 80], sizes = [16, 8], strides = [1, 1]} : vector<16x96xf32> to vector<16x8xf32>
    %262 = vector.shape_cast %261 : vector<16x8xf32> to vector<2x8x8xf32>
    "tpu.trace_start"() <{level = 10 : i32, message = "bqd,bkd->bqk"}> : () -> ()
    %cst_124 = arith.constant dense<0.000000e+00> : vector<2x8x8xf32>
    %263 = tpu.matmul %258, %260, %cst_124 {dimension_numbers = #tpu.dot_dimension_numbers<[2], [2], [1], [1], [0, 0, 0, 1, 1, 1], [0], [0]>} : vector<2x8x8xf32>, vector<2x8x8xf32>, vector<2x8x8xf32> -> vector<2x8x8xf32>
    "tpu.trace_stop"() : () -> ()
    %cst_125 = arith.constant dense<0xFF800000> : vector<2x8xf32>
    %264 = vector.multi_reduction <maximumf>, %263, %cst_125 [2] : vector<2x8x8xf32> to vector<2x8xf32>
    %265 = vector.shape_cast %264 : vector<2x8xf32> to vector<2x8x1xf32>
    %266 = vector.broadcast %265 : vector<2x8x1xf32> to vector<2x8x8xf32>
    %267 = arith.subf %263, %266 : vector<2x8x8xf32>
    %268 = math.exp %267 : vector<2x8x8xf32>
    %cst_126 = arith.constant dense<0.000000e+00> : vector<2x8xf32>
    %269 = vector.multi_reduction <add>, %268, %cst_126 [2] : vector<2x8x8xf32> to vector<2x8xf32>
    %270 = vector.shape_cast %269 : vector<2x8xf32> to vector<2x8x1xf32>
    %271 = tpu.reciprocal %270 : vector<2x8x1xf32> -> vector<2x8x1xf32>
    %272 = vector.broadcast %271 : vector<2x8x1xf32> to vector<2x8x8xf32>
    %273 = arith.mulf %268, %272 : vector<2x8x8xf32>
    "tpu.trace_start"() <{level = 10 : i32, message = "bqk,bkd->bqd"}> : () -> ()
    %cst_127 = arith.constant dense<0.000000e+00> : vector<2x8x8xf32>
    %274 = tpu.matmul %273, %262, %cst_127 {dimension_numbers = #tpu.dot_dimension_numbers<[2], [1], [1], [2], [0, 0, 0, 1, 1, 2], [0], [0]>} : vector<2x8x8xf32>, vector<2x8x8xf32>, vector<2x8x8xf32> -> vector<2x8x8xf32>
    "tpu.trace_stop"() : () -> ()
    %275 = vector.shape_cast %274 : vector<2x8x8xf32> to vector<16x8xf32>
    %c1_128 = arith.constant 1 : index
    %c144_129 = arith.constant 144 : index
    %c0_130 = arith.constant 0 : index
    %276 = vector.load %arg1[%c1_128, %c144_129, %c0_130] : memref<2x160x96xf32, #tpu.memory_space<vmem>>, vector<1x8x32xf32>
    %277 = vector.shape_cast %276 : vector<1x8x32xf32> to vector<8x32xf32>
    %cst_131 = arith.constant dense<0.000000e+00> : vector<16x32xf32>
    %278 = tpu.matmul %275, %277, %cst_131 {dimension_numbers = #tpu.dot_dimension_numbers<[1], [0], [0], [1], [0, 0, 1, 1], [], []>} : vector<16x8xf32>, vector<8x32xf32>, vector<16x32xf32> -> vector<16x32xf32>
    %279 = arith.addf %256, %278 : vector<16x32xf32>
    %280 = vector.extract_strided_slice %210 {offsets = [0, 24], sizes = [16, 8], strides = [1, 1]} : vector<16x96xf32> to vector<16x8xf32>
    %281 = vector.shape_cast %280 : vector<16x8xf32> to vector<2x8x8xf32>
    %282 = vector.extract_strided_slice %210 {offsets = [0, 56], sizes = [16, 8], strides = [1, 1]} : vector<16x96xf32> to vector<16x8xf32>
    %283 = vector.shape_cast %282 : vector<16x8xf32> to vector<2x8x8xf32>
    %284 = vector.extract_strided_slice %210 {offsets = [0, 88], sizes = [16, 8], strides = [1, 1]} : vector<16x96xf32> to vector<16x8xf32>
    %285 = vector.shape_cast %284 : vector<16x8xf32> to vector<2x8x8xf32>
    "tpu.trace_start"() <{level = 10 : i32, message = "bqd,bkd->bqk"}> : () -> ()
    %cst_132 = arith.constant dense<0.000000e+00> : vector<2x8x8xf32>
    %286 = tpu.matmul %281, %283, %cst_132 {dimension_numbers = #tpu.dot_dimension_numbers<[2], [2], [1], [1], [0, 0, 0, 1, 1, 1], [0], [0]>} : vector<2x8x8xf32>, vector<2x8x8xf32>, vector<2x8x8xf32> -> vector<2x8x8xf32>
    "tpu.trace_stop"() : () -> ()
    %cst_133 = arith.constant dense<0xFF800000> : vector<2x8xf32>
    %287 = vector.multi_reduction <maximumf>, %286, %cst_133 [2] : vector<2x8x8xf32> to vector<2x8xf32>
    %288 = vector.shape_cast %287 : vector<2x8xf32> to vector<2x8x1xf32>
    %289 = vector.broadcast %288 : vector<2x8x1xf32> to vector<2x8x8xf32>
    %290 = arith.subf %286, %289 : vector<2x8x8xf32>
    %291 = math.exp %290 : vector<2x8x8xf32>
    %cst_134 = arith.constant dense<0.000000e+00> : vector<2x8xf32>
    %292 = vector.multi_reduction <add>, %291, %cst_134 [2] : vector<2x8x8xf32> to vector<2x8xf32>
    %293 = vector.shape_cast %292 : vector<2x8xf32> to vector<2x8x1xf32>
    %294 = tpu.reciprocal %293 : vector<2x8x1xf32> -> vector<2x8x1xf32>
    %295 = vector.broadcast %294 : vector<2x8x1xf32> to vector<2x8x8xf32>
    %296 = arith.mulf %291, %295 : vector<2x8x8xf32>
    "tpu.trace_start"() <{level = 10 : i32, message = "bqk,bkd->bqd"}> : () -> ()
    %cst_135 = arith.constant dense<0.000000e+00> : vector<2x8x8xf32>
    %297 = tpu.matmul %296, %285, %cst_135 {dimension_numbers = #tpu.dot_dimension_numbers<[2], [1], [1], [2], [0, 0, 0, 1, 1, 2], [0], [0]>} : vector<2x8x8xf32>, vector<2x8x8xf32>, vector<2x8x8xf32> -> vector<2x8x8xf32>
    "tpu.trace_stop"() : () -> ()
    %298 = vector.shape_cast %297 : vector<2x8x8xf32> to vector<16x8xf32>
    %c1_136 = arith.constant 1 : index
    %c152_137 = arith.constant 152 : index
    %c0_138 = arith.constant 0 : index
    %299 = vector.load %arg1[%c1_136, %c152_137, %c0_138] : memref<2x160x96xf32, #tpu.memory_space<vmem>>, vector<1x8x32xf32>
    %300 = vector.shape_cast %299 : vector<1x8x32xf32> to vector<8x32xf32>
    %cst_139 = arith.constant dense<0.000000e+00> : vector<16x32xf32>
    %301 = tpu.matmul %298, %300, %cst_139 {dimension_numbers = #tpu.dot_dimension_numbers<[1], [0], [0], [1], [0, 0, 1, 1], [], []>} : vector<16x8xf32>, vector<8x32xf32>, vector<16x32xf32> -> vector<16x32xf32>
    %302 = arith.addf %279, %301 : vector<16x32xf32>
    %303 = arith.addf %166, %302 : vector<16x32xf32>
    %cst_140 = arith.constant dense<0.000000e+00> : vector<16xf32>
    %304 = vector.multi_reduction <add>, %303, %cst_140 [1] : vector<16x32xf32> to vector<16xf32>
    %305 = vector.shape_cast %304 : vector<16xf32> to vector<16x1xf32>
    %cst_141 = arith.constant 3.200000e+01 : f32
    %306 = vector.broadcast %cst_141 : f32 to vector<16x1xf32>
    %307 = arith.divf %305, %306 : vector<16x1xf32>
    %308 = vector.broadcast %307 : vector<16x1xf32> to vector<16x32xf32>
    %309 = arith.subf %303, %308 : vector<16x32xf32>
    %310 = arith.mulf %309, %309 : vector<16x32xf32>
    %cst_142 = arith.constant dense<0.000000e+00> : vector<16xf32>
    %311 = vector.multi_reduction <add>, %310, %cst_142 [1] : vector<16x32xf32> to vector<16xf32>
    %312 = vector.shape_cast %311 : vector<16xf32> to vector<16x1xf32>
    %cst_143 = arith.constant 3.200000e+01 : f32
    %313 = vector.broadcast %cst_143 : f32 to vector<16x1xf32>
    %314 = arith.divf %312, %313 : vector<16x1xf32>
    %315 = vector.broadcast %307 : vector<16x1xf32> to vector<16x32xf32>
    %316 = arith.subf %303, %315 : vector<16x32xf32>
    %cst_144 = arith.constant 9.99999974E-6 : f32
    %317 = vector.broadcast %cst_144 : f32 to vector<16x1xf32>
    %318 = arith.addf %314, %317 : vector<16x1xf32>
    %319 = math.rsqrt %318 : vector<16x1xf32>
    %320 = vector.broadcast %319 : vector<16x1xf32> to vector<16x32xf32>
    %321 = arith.mulf %316, %320 : vector<16x32xf32>
    %322 = arith.mulf %321, %180 : vector<16x32xf32>
    %323 = arith.addf %322, %182 : vector<16x32xf32>
    %cst_145 = arith.constant dense<0.000000e+00> : vector<16x64xf32>
    %324 = tpu.matmul %323, %186, %cst_145 {dimension_numbers = #tpu.dot_dimension_numbers<[1], [0], [0], [1], [0, 0, 1, 1], [], []>} : vector<16x32xf32>, vector<32x64xf32>, vector<16x64xf32> -> vector<16x64xf32>
    %325 = arith.addf %324, %170 : vector<16x64xf32>
    %cst_146 = arith.constant 0.000000e+00 : f32
    %326 = vector.broadcast %cst_146 : f32 to vector<16x64xf32>
    %327 = arith.maximumf %325, %326 : vector<16x64xf32>
    %cst_147 = arith.constant dense<0.000000e+00> : vector<16x32xf32>
    %328 = tpu.matmul %327, %188, %cst_147 {dimension_numbers = #tpu.dot_dimension_numbers<[1], [0], [0], [1], [0, 0, 1, 1], [], []>} : vector<16x64xf32>, vector<64x32xf32>, vector<16x32xf32> -> vector<16x32xf32>
    %329 = arith.addf %303, %328 : vector<16x32xf32>
    %330 = arith.addf %329, %174 : vector<16x32xf32>
    %331 = vector.shape_cast %330 : vector<16x32xf32> to vector<2x8x32xf32>
    %cst_148 = arith.constant dense<0.000000e+00> : vector<2x32xf32>
    %332 = vector.multi_reduction <add>, %331, %cst_148 [1] : vector<2x8x32xf32> to vector<2x32xf32>
    %cst_149 = arith.constant 1.250000e-01 : f32
    %333 = vector.broadcast %cst_149 : f32 to vector<2x32xf32>
    %334 = arith.mulf %332, %333 : vector<2x32xf32>
    %c16_150 = arith.constant 16 : index
    %c0_151 = arith.constant 0 : index
    %335 = vector.load %arg3[%c16_150, %c0_151] : memref<56x32xf32, #tpu.memory_space<vmem>>, vector<32x32xf32>
    %c48_152 = arith.constant 48 : index
    %c0_153 = arith.constant 0 : index
    %336 = vector.load %arg3[%c48_152, %c0_153] : memref<56x32xf32, #tpu.memory_space<vmem>>, vector<2x32xf32>
    %cst_154 = arith.constant dense<0.000000e+00> : vector<2x32xf32>
    %337 = tpu.matmul %334, %335, %cst_154 {dimension_numbers = #tpu.dot_dimension_numbers<[1], [0], [0], [1], [0, 0, 1, 1], [], []>} : vector<2x32xf32>, vector<32x32xf32>, vector<2x32xf32> -> vector<2x32xf32>
    %338 = arith.addf %337, %336 : vector<2x32xf32>
    %339 = vector.extract_strided_slice %338 {offsets = [0, 0], sizes = [2, 3], strides = [1, 1]} : vector<2x32xf32> to vector<2x3xf32>
    %c0_155 = arith.constant 0 : index
    %c0_156 = arith.constant 0 : index
    %340 = vector.load %arg4[%c0_155, %c0_156] : memref<2x3xf32, #tpu.memory_space<vmem>>, vector<2x3xf32>
    tpu.vector_store %arg4[%c0_155, %c0_156], %339 {strides = array<i32>} : memref<2x3xf32, #tpu.memory_space<vmem>>, vector<2x3xf32>,
    return
  }
}

</mosaic_0001>

<llo_original>
// kernel: sentiment_transformer.1
$region0: #{sentiment_transformer.1}
  #allocation0 [shape = 'u32[]', space=smem, size = 0x4, offset = 0x4, fixed_abs, tag = 'smem constant byte address 0x4 - core index']
  #allocation1 [shape = 'u32[72,128]{1,0:T(1,128)}', space=vmem, size = 0x9000, scoped, tag = 'internal scratch']
  %s0 = inlined_call_operand.vmem [shape: f32[16,32], index: 0, kind: input, shape index: {}]
  %s1 = inlined_call_operand.vmem [shape: f32[2,160,96], index: 1, kind: input, shape index: {}]
  %s2 = inlined_call_operand.vmem [shape: f32[2,128,96], index: 2, kind: input, shape index: {}]
  %s3 = inlined_call_operand.vmem [shape: f32[56,32], index: 3, kind: input, shape index: {}]
  %s4 = inlined_call_operand.hbm [shape: f32[2,3], index: 4, kind: output, shape index: {}]
  %s5 = sld [smem:[#allocation0]]
  $region26: #{sentiment_transformer.1} parent=0
    _
  %s7 = ssub.s32 1, %s5
  %s8 = scalar_select 0, %s7, %s5
  $region1: #{sentiment_transformer.1} parent=0
    #allocation2 [shape = 'u8[1024]{0}', space=vmem, size = 0x400, scoped, tag = 'output window, operand 0, single buffered']
    #allocation3 [shape = 's32[1]{0}', space=sflag, size = 0x4, scoped, tag = 'scoped memory for sentiment_transformer.1']
    %9 = vsyncpa [#allocation3], 0
    // Predicated region
    $region2: #{sentiment_transformer.1} parent=1 // pred_check
      _
    $region3: #{sentiment_transformer.1} parent=1 // pred_check_branch
      %11 = sbr.rel (0) target = $region5
    $region4: #{sentiment_transformer.1} parent=1 // pred_region
      _
    $region5: #{sentiment_transformer.1} parent=1 // pred_fallthru
      _
    // Predicated region
    $region6: #{sentiment_transformer.1} parent=1 // pred_check
      _
    $region7: #{sentiment_transformer.1} parent=1 // pred_check_branch
      %13 = sbr.rel (0) target = $region9
    $region8: #{sentiment_transformer.1} parent=1 // pred_region
      _
    $region9: #{sentiment_transformer.1} parent=1 // pred_fallthru
      _
    // Predicated region
    $region10: #{sentiment_transformer.1} parent=1 // pred_check
      _
    $region11: #{sentiment_transformer.1} parent=1 // pred_check_branch
      %15 = sbr.rel (0) target = $region13
    $region12: #{sentiment_transformer.1} parent=1 // pred_region
      _
    $region13: #{sentiment_transformer.1} parent=1 // pred_fallthru
      _
    // Predicated region
    $region14: #{sentiment_transformer.1} parent=1 // pred_check
      _
    $region15: #{sentiment_transformer.1} parent=1 // pred_check_branch
      %17 = sbr.rel (0) target = $region17
    $region16: #{sentiment_transformer.1} parent=1 // pred_region
      _
    $region17: #{sentiment_transformer.1} parent=1 // pred_fallthru
      _
    %v18 = vld [vmem:[%s0] sm:$0xff]
    %v19 = vld [vmem:[%s0 + $0x8] sm:$0xff]
    %v20 = vld [vmem:[%s3] sm:$0xff]
    %v21 = vld [vmem:[%s3 + $0x8] sm:$0xff]
    %v22 = vadd.f32 %v18, %v20
    %v23 = vadd.f32 %v19, %v21
    %v24 = vld [vmem:[%s2] sm:$0xff]
    %v25 = vld [vmem:[%s2 + $0x8] sm:$0xff]
    %v26 = vld [vmem:[%s2 + $0x10] sm:$0xff]
    %v27 = vld [vmem:[%s2 + $0x18] sm:$0xff]
    %v28 = vld [vmem:[%s2 + $0x20] sm:$0xff]
    %v29 = vld [vmem:[%s2 + $0x28] sm:$0xff]
    %v30 = vld [vmem:[%s2 + $0x30] sm:$0xff]
    %v31 = vld [vmem:[%s2 + $0x38] sm:$0xff]
    %v32 = vld [vmem:[%s2 + $0x40] sm:$0xff]
    %v33 = vld [vmem:[%s2 + $0x48] sm:$0xff]
    %v34 = vld [vmem:[%s2 + $0x50] sm:$0xff]
    %v35 = vld [vmem:[%s2 + $0x58] sm:$0xff]
    %v36 = vld [vmem:[%s2 + $0x60] sm:$0xff]
    %v37 = vld [vmem:[%s2 + $0x68] sm:$0xff]
    %v38 = vld [vmem:[%s2 + $0x70] sm:$0xff]
    %v39 = vld [vmem:[%s2 + $0x78] sm:$0xff]
    %v40 = vld [vmem:[%s1] sm:$0xff]
    %v41 = vld [vmem:[%s1 + $0x8] sm:$0xff]
    %v42 = vld [vmem:[%s1 + $0x10] sm:$0xff]
    %v43 = vld [vmem:[%s1 + $0x18] sm:$0xff]
    %v44 = vld [vmem:[%s1 + $0x20] sm:$0xff]
    %v45 = vld [vmem:[%s1 + $0x28] sm:$0xff]
    %v46 = vld [vmem:[%s1 + $0x30] sm:$0xff]
    %v47 = vld [vmem:[%s1 + $0x38] sm:$0xff]
    %v48 = vld [vmem:[%s1 + $0x40] sm:$0xff]
    %v49 = vld [vmem:[%s1 + $0x48] sm:$0xff]
    %v50 = vld [vmem:[%s1 + $0x50] sm:$0xff]
    %v51 = vld [vmem:[%s1 + $0x58] sm:$0xff]
    %v52 = vld [vmem:[%s1 + $0x60] sm:$0xff]
    %v53 = vld [vmem:[%s1 + $0x68] sm:$0xff]
    %v54 = vld [vmem:[%s1 + $0x70] sm:$0xff]
    %v55 = vld [vmem:[%s1 + $0x78] sm:$0xff]
    %vm56 = vcmask 261120
    %v57 = vsel %vm56, %v22, 0.0
    %58 = vadd.xlane.f32.xlu0 %v57
    %v59 = vpop.xlane.xlu0 %58
    %v60 = vsel %vm56, %v23, 0.0
    %61 = vadd.xlane.f32.xlu0 %v60
    %v62 = vpop.xlane.xlu0 %61
    %v63 = vrcp.pop 32.0
    %v64 = vmul.f32 32.0, %v63
    %v65 = vsub.f32 1.0, %v64
    %v66 = vmul.f32 %v63, %v65
    %v67 = vadd.f32 %v63, %v66
    %vm68 = vweird.f32 %v63
    %v69 = vsel %vm68, %v63, %v67
    %v70 = vmul.f32 %v59, %v69
    %v71 = vmul.f32 %v62, %v69
    %v72 = vsub.f32 %v22, %v70
    %v73 = vsub.f32 %v23, %v71
    %v74 = vmul.f32 %v72, %v72
    %v75 = vmul.f32 %v73, %v73
    %v76 = vsel %vm56, %v74, 0.0
    %77 = vadd.xlane.f32.xlu0 %v76
    %v78 = vpop.xlane.xlu0 %77
    %v79 = vsel %vm56, %v75, 0.0
    %80 = vadd.xlane.f32.xlu0 %v79
    %v81 = vpop.xlane.xlu0 %80
    %v82 = vmul.f32 %v78, %v69
    %v83 = vmul.f32 %v81, %v69
    %v84 = vadd.f32 %v82, 1e-05
    %v85 = vadd.f32 %v83, 1e-05
    %v86 = vrsqrt.pop %v84
    %v87 = vmul.f32 %v86, %v84
    %v88 = vmul.f32 %v87, %v86
    %v89 = vmul.f32 0.5, %v88
    %v90 = vsub.f32 1.5, %v89
    %v91 = vmul.f32 %v86, %v90
    %vm92 = vweird.f32 %v84
    %vm93 = vweird.f32 %v86
    %vm94 = vmor %vm92, %vm93
    %v95 = vsel %vm94, %v86, %v91
    %v96 = vrsqrt.pop %v85
    %v97 = vmul.f32 %v96, %v85
    %v98 = vmul.f32 %v97, %v96
    %v99 = vmul.f32 0.5, %v98
    %v100 = vsub.f32 1.5, %v99
    %v101 = vmul.f32 %v96, %v100
    %vm102 = vweird.f32 %v85
    %vm103 = vweird.f32 %v96
    %vm104 = vmor %vm102, %vm103
    %v105 = vsel %vm104, %v96, %v101
    %v106 = vmul.f32 %v72, %v95
    %v107 = vmul.f32 %v73, %v105
    %v108 = vmul.f32 %v106, %v32
    %v109 = vmul.f32 %v107, %v33
    %v110 = vadd.f32 %v108, %v34
    %v111 = vadd.f32 %v109, %v35
    %v113 = vsel %vm56, %v110, 0
    %v116 = vsel %vm56, %v111, 0
    %118 = vmatpush.msra.mxu0 0.0
    %119 = vmatpush.msra.mxu0 0.0
    %120 = vmatpush.msra.mxu0 0.0
    %121 = vmatpush.msra.mxu0 0.0
    %122 = vmatpush.msra.mxu0 0.0
    %123 = vmatpush.msra.mxu0 0.0
    %124 = vmatpush.msra.mxu0 0.0
    %125 = vmatpush.msra.mxu0 0.0
    %126 = vmatpush.msra.mxu0 0.0
    %127 = vmatpush.msra.mxu0 0.0
    %128 = vmatpush.msra.mxu0 0.0
    %129 = vmatpush.msra.mxu0 0.0
    %130 = vmatpush.msra.mxu0 %v43
    %131 = vmatpush.msra.mxu0 %v42
    %132 = vmatpush.msra.mxu0 %v41
    %133 = vmatpush.msra.mxu0 %v40
    %134 = vmatmul.f32.gmra.mxu0 %v113
    %v135 = vpop.f32.mrf.mxu0
    %v136 = vadd.f32 %v24, %v135
    %137 = vmatmul.f32.gmra.mxu0 %v116
    %v138 = vpop.f32.mrf.mxu0
    %v139 = vadd.f32 %v25, %v138
    %140 = vdwg.mxu0
    %142 = vrot.lane.b32.xlu0 %v136, 96
    %v143 = vpop.permute.xlu0 %142
    %vm144 = vcmask 64512
    %v145 = vsel %vm144, %v136, 0
    %v147 = vsel %vm144, %v143, 0
    %149 = vmatpush.xpose.msra.mxu0 0.0
    %150 = vmatpush.xpose.msra.mxu0 0.0
    %151 = vmatpush.xpose.msra.mxu0 0.0
    %152 = vmatpush.xpose.msra.mxu0 0.0
    %153 = vmatpush.xpose.msra.mxu0 0.0
    %154 = vmatpush.xpose.msra.mxu0 0.0
    %155 = vmatpush.xpose.msra.mxu0 0.0
    %156 = vmatpush.xpose.msra.mxu0 0.0
    %157 = vmatpush.xpose.msra.mxu0 0.0
    %158 = vmatpush.xpose.msra.mxu0 0.0
    %159 = vmatpush.xpose.msra.mxu0 0.0
    %160 = vmatpush.xpose.msra.mxu0 0.0
    %161 = vmatpush.xpose.msra.mxu0 0.0
    %162 = vmatpush.xpose.msra.mxu0 0.0
    %163 = vmatpush.xpose.msra.mxu0 0.0
    %164 = vmatpush.xpose.msra.mxu0 %v147
    %165 = vmatmul.f32.gmra.mxu0 %v145
    %v166 = vpop.f32.mrf.mxu0
    %v167 = vadd.f32 0.0, %v166
    %168 = vdwg.mxu0
    %170 = vrot.lane.b32.xlu0 %v139, 96
    %v171 = vpop.permute.xlu0 %170
    %v172 = vsel %vm144, %v139, 0
    %v174 = vsel %vm144, %v171, 0
    %176 = vmatpush.xpose.msra.mxu0 0.0
    %177 = vmatpush.xpose.msra.mxu0 0.0
    %178 = vmatpush.xpose.msra.mxu0 0.0
    %179 = vmatpush.xpose.msra.mxu0 0.0
    %180 = vmatpush.xpose.msra.mxu0 0.0
    %181 = vmatpush.xpose.msra.mxu0 0.0
    %182 = vmatpush.xpose.msra.mxu0 0.0
    %183 = vmatpush.xpose.msra.mxu0 0.0
    %184 = vmatpush.xpose.msra.mxu0 0.0
    %185 = vmatpush.xpose.msra.mxu0 0.0
    %186 = vmatpush.xpose.msra.mxu0 0.0
    %187 = vmatpush.xpose.msra.mxu0 0.0
    %188 = vmatpush.xpose.msra.mxu0 0.0
    %189 = vmatpush.xpose.msra.mxu0 0.0
    %190 = vmatpush.xpose.msra.mxu0 0.0
    %191 = vmatpush.xpose.msra.mxu0 %v174
    %192 = vmatmul.f32.gmra.mxu0 %v172
    %v193 = vpop.f32.mrf.mxu0
    %v194 = vadd.f32 0.0, %v193
    %195 = vdwg.mxu0
    %v196 = vsel %vm144, %v167, -inf
    %197 = vmax.xlane.f32.xlu0 %v196
    %v198 = vpop.xlane.xlu0 %197
    %v199 = vsel %vm144, %v194, -inf
    %200 = vmax.xlane.f32.xlu0 %v199
    %v201 = vpop.xlane.xlu0 %200
    %v202 = vsub.f32 %v167, %v198
    %v203 = vsub.f32 %v194, %v201
    %v204 = vmul.f32 %v202, 1.442695
    %v205 = vpow.pop %v204
    %v206 = vmul.f32 %v203, 1.442695
    %v207 = vpow.pop %v206
    %v208 = vsel %vm144, %v205, 0.0
    %209 = vadd.xlane.f32.xlu0 %v208
    %v210 = vpop.xlane.xlu0 %209
    %v211 = vsel %vm144, %v207, 0.0
    %212 = vadd.xlane.f32.xlu0 %v211
    %v213 = vpop.xlane.xlu0 %212
    %v214 = vrcp.pop %v210
    %v215 = vmul.f32 %v210, %v214
    %v216 = vsub.f32 1.0, %v215
    %v217 = vmul.f32 %v214, %v216
    %v218 = vadd.f32 %v214, %v217
    %vm219 = vweird.f32 %v210
    %vm220 = vweird.f32 %v214
    %vm221 = vmor %vm219, %vm220
    %v222 = vsel %vm221, %v214, %v218
    %v223 = vand.u32 2147483647, %v210
    %vm224 = vcmp.eq.f32.partialorder %v223, 8.507059e+37
    %v225 = vand.u32 %v210, 2147483648
    %v226 = vor.u32 1.1754944e-38, %v225
    %v227 = vsel %vm224, %v226, %v222
    %v228 = vrcp.pop %v213
    %v229 = vmul.f32 %v213, %v228
    %v230 = vsub.f32 1.0, %v229
    %v231 = vmul.f32 %v228, %v230
    %v232 = vadd.f32 %v228, %v231
    %vm233 = vweird.f32 %v213
    %vm234 = vweird.f32 %v228
    %vm235 = vmor %vm233, %vm234
    %v236 = vsel %vm235, %v228, %v232
    %v237 = vand.u32 2147483647, %v213
    %vm238 = vcmp.eq.f32.partialorder %v237, 8.507059e+37
    %v239 = vand.u32 %v213, 2147483648
    %v240 = vor.u32 1.1754944e-38, %v239
    %v241 = vsel %vm238, %v240, %v236
    %v242 = vmul.f32 %v205, %v227
    %v243 = vmul.f32 %v207, %v241
    %244 = vrot.lane.b32.xlu0 %v136, 64
    %v245 = vpop.permute.xlu0 %244
    %v248 = vsel %vm144, %v242, 0
    %250 = vmatpush.msra.mxu0 0.0
    %251 = vmatpush.msra.mxu0 0.0
    %252 = vmatpush.msra.mxu0 0.0
    %253 = vmatpush.msra.mxu0 0.0
    %254 = vmatpush.msra.mxu0 0.0
    %255 = vmatpush.msra.mxu0 0.0
    %256 = vmatpush.msra.mxu0 0.0
    %257 = vmatpush.msra.mxu0 0.0
    %258 = vmatpush.msra.mxu0 0.0
    %259 = vmatpush.msra.mxu0 0.0
    %260 = vmatpush.msra.mxu0 0.0
    %261 = vmatpush.msra.mxu0 0.0
    %262 = vmatpush.msra.mxu0 0.0
    %263 = vmatpush.msra.mxu0 0.0
    %264 = vmatpush.msra.mxu0 0.0
    %265 = vmatpush.msra.mxu0 %v245
    %266 = vmatmul.f32.gmra.mxu0 %v248
    %v267 = vpop.f32.mrf.mxu0
    %v268 = vadd.f32 0.0, %v267
    %269 = vdwg.mxu0
    %270 = vrot.lane.b32.xlu0 %v139, 64
    %v271 = vpop.permute.xlu0 %270
    %v274 = vsel %vm144, %v243, 0
    %276 = vmatpush.msra.mxu0 0.0
    %277 = vmatpush.msra.mxu0 0.0
    %278 = vmatpush.msra.mxu0 0.0
    %279 = vmatpush.msra.mxu0 0.0
    %280 = vmatpush.msra.mxu0 0.0
    %281 = vmatpush.msra.mxu0 0.0
    %282 = vmatpush.msra.mxu0 0.0
    %283 = vmatpush.msra.mxu0 0.0
    %284 = vmatpush.msra.mxu0 0.0
    %285 = vmatpush.msra.mxu0 0.0
    %286 = vmatpush.msra.mxu0 0.0
    %287 = vmatpush.msra.mxu0 0.0
    %288 = vmatpush.msra.mxu0 0.0
    %289 = vmatpush.msra.mxu0 0.0
    %290 = vmatpush.msra.mxu0 0.0
    %291 = vmatpush.msra.mxu0 %v271
    %292 = vmatmul.f32.gmra.mxu0 %v274
    %v293 = vpop.f32.mrf.mxu0
    %v294 = vadd.f32 0.0, %v293
    %295 = vdwg.mxu0
    %v296 = vld [vmem:[%s1 + $0x80] sm:$0xff]
    %v298 = vsel %vm144, %v268, 0
    %v301 = vsel %vm144, %v294, 0
    %303 = vmatpush.msra.mxu0 0.0
    %304 = vmatpush.msra.mxu0 0.0
    %305 = vmatpush.msra.mxu0 0.0
    %306 = vmatpush.msra.mxu0 0.0
    %307 = vmatpush.msra.mxu0 0.0
    %308 = vmatpush.msra.mxu0 0.0
    %309 = vmatpush.msra.mxu0 0.0
    %310 = vmatpush.msra.mxu0 0.0
    %311 = vmatpush.msra.mxu0 0.0
    %312 = vmatpush.msra.mxu0 0.0
    %313 = vmatpush.msra.mxu0 0.0
    %314 = vmatpush.msra.mxu0 0.0
    %315 = vmatpush.msra.mxu0 0.0
    %316 = vmatpush.msra.mxu0 0.0
    %317 = vmatpush.msra.mxu0 0.0
    %318 = vmatpush.msra.mxu0 %v296
    %319 = vmatmul.f32.gmra.mxu0 %v298
    %v320 = vpop.f32.mrf.mxu0
    %v321 = vadd.f32 0.0, %v320
    %322 = vmatmul.f32.gmra.mxu0 %v301
    %v323 = vpop.f32.mrf.mxu0
    %v324 = vadd.f32 0.0, %v323
    %325 = vdwg.mxu0
    %v326 = vadd.f32 %v28, %v321
    %v327 = vadd.f32 %v29, %v324
    %328 = vrot.lane.b32.xlu0 %v136, 120
    %v329 = vpop.permute.xlu0 %328
    %330 = vrot.lane.b32.xlu0 %v136, 88
    %v331 = vpop.permute.xlu0 %330
    %v332 = vsel %vm144, %v329, 0
    %v334 = vsel %vm144, %v331, 0
    %336 = vmatpush.xpose.msra.mxu0 0.0
    %337 = vmatpush.xpose.msra.mxu0 0.0
    %338 = vmatpush.xpose.msra.mxu0 0.0
    %339 = vmatpush.xpose.msra.mxu0 0.0
    %340 = vmatpush.xpose.msra.mxu0 0.0
    %341 = vmatpush.xpose.msra.mxu0 0.0
    %342 = vmatpush.xpose.msra.mxu0 0.0
    %343 = vmatpush.xpose.msra.mxu0 0.0
    %344 = vmatpush.xpose.msra.mxu0 0.0
    %345 = vmatpush.xpose.msra.mxu0 0.0
    %346 = vmatpush.xpose.msra.mxu0 0.0
    %347 = vmatpush.xpose.msra.mxu0 0.0
    %348 = vmatpush.xpose.msra.mxu0 0.0
    %349 = vmatpush.xpose.msra.mxu0 0.0
    %350 = vmatpush.xpose.msra.mxu0 0.0
    %351 = vmatpush.xpose.msra.mxu0 %v334
    %352 = vmatmul.f32.gmra.mxu0 %v332
    %v353 = vpop.f32.mrf.mxu0
    %v354 = vadd.f32 0.0, %v353
    %355 = vdwg.mxu0
    %356 = vrot.lane.b32.xlu0 %v139, 120
    %v357 = vpop.permute.xlu0 %356
    %358 = vrot.lane.b32.xlu0 %v139, 88
    %v359 = vpop.permute.xlu0 %358
    %v360 = vsel %vm144, %v357, 0
    %v362 = vsel %vm144, %v359, 0
    %364 = vmatpush.xpose.msra.mxu0 0.0
    %365 = vmatpush.xpose.msra.mxu0 0.0
    %366 = vmatpush.xpose.msra.mxu0 0.0
    %367 = vmatpush.xpose.msra.mxu0 0.0
    %368 = vmatpush.xpose.msra.mxu0 0.0
    %369 = vmatpush.xpose.msra.mxu0 0.0
    %370 = vmatpush.xpose.msra.mxu0 0.0
    %371 = vmatpush.xpose.msra.mxu0 0.0
    %372 = vmatpush.xpose.msra.mxu0 0.0
    %373 = vmatpush.xpose.msra.mxu0 0.0
    %374 = vmatpush.xpose.msra.mxu0 0.0
    %375 = vmatpush.xpose.msra.mxu0 0.0
    %376 = vmatpush.xpose.msra.mxu0 0.0
    %377 = vmatpush.xpose.msra.mxu0 0.0
    %378 = vmatpush.xpose.msra.mxu0 0.0
    %379 = vmatpush.xpose.msra.mxu0 %v362
    %380 = vmatmul.f32.gmra.mxu0 %v360
    %v381 = vpop.f32.mrf.mxu0
    %v382 = vadd.f32 0.0, %v381
    %383 = vdwg.mxu0
    %v384 = vsel %vm144, %v354, -inf
    %385 = vmax.xlane.f32.xlu0 %v384
    %v386 = vpop.xlane.xlu0 %385
    %v387 = vsel %vm144, %v382, -inf
    %388 = vmax.xlane.f32.xlu0 %v387
    %v389 = vpop.xlane.xlu0 %388
    %v390 = vsub.f32 %v354, %v386
    %v391 = vsub.f32 %v382, %v389
    %v392 = vmul.f32 %v390, 1.442695
    %v393 = vpow.pop %v392
    %v394 = vmul.f32 %v391, 1.442695
    %v395 = vpow.pop %v394
    %v396 = vsel %vm144, %v393, 0.0
    %397 = vadd.xlane.f32.xlu0 %v396
    %v398 = vpop.xlane.xlu0 %397
    %v399 = vsel %vm144, %v395, 0.0
    %400 = vadd.xlane.f32.xlu0 %v399
    %v401 = vpop.xlane.xlu0 %400
    %v402 = vrcp.pop %v398
    %v403 = vmul.f32 %v398, %v402
    %v404 = vsub.f32 1.0, %v403
    %v405 = vmul.f32 %v402, %v404
    %v406 = vadd.f32 %v402, %v405
    %vm407 = vweird.f32 %v398
    %vm408 = vweird.f32 %v402
    %vm409 = vmor %vm407, %vm408
    %v410 = vsel %vm409, %v402, %v406
    %v411 = vand.u32 2147483647, %v398
    %vm412 = vcmp.eq.f32.partialorder %v411, 8.507059e+37
    %v413 = vand.u32 %v398, 2147483648
    %v414 = vor.u32 1.1754944e-38, %v413
    %v415 = vsel %vm412, %v414, %v410
    %v416 = vrcp.pop %v401
    %v417 = vmul.f32 %v401, %v416
    %v418 = vsub.f32 1.0, %v417
    %v419 = vmul.f32 %v416, %v418
    %v420 = vadd.f32 %v416, %v419
    %vm421 = vweird.f32 %v401
    %vm422 = vweird.f32 %v416
    %vm423 = vmor %vm421, %vm422
    %v424 = vsel %vm423, %v416, %v420
    %v425 = vand.u32 2147483647, %v401
    %vm426 = vcmp.eq.f32.partialorder %v425, 8.507059e+37
    %v427 = vand.u32 %v401, 2147483648
    %v428 = vor.u32 1.1754944e-38, %v427
    %v429 = vsel %vm426, %v428, %v424
    %v430 = vmul.f32 %v393, %v415
    %v431 = vmul.f32 %v395, %v429
    %432 = vrot.lane.b32.xlu0 %v136, 56
    %v433 = vpop.permute.xlu0 %432
    %v436 = vsel %vm144, %v430, 0
    %438 = vmatpush.msra.mxu0 0.0
    %439 = vmatpush.msra.mxu0 0.0
    %440 = vmatpush.msra.mxu0 0.0
    %441 = vmatpush.msra.mxu0 0.0
    %442 = vmatpush.msra.mxu0 0.0
    %443 = vmatpush.msra.mxu0 0.0
    %444 = vmatpush.msra.mxu0 0.0
    %445 = vmatpush.msra.mxu0 0.0
    %446 = vmatpush.msra.mxu0 0.0
    %447 = vmatpush.msra.mxu0 0.0
    %448 = vmatpush.msra.mxu0 0.0
    %449 = vmatpush.msra.mxu0 0.0
    %450 = vmatpush.msra.mxu0 0.0
    %451 = vmatpush.msra.mxu0 0.0
    %452 = vmatpush.msra.mxu0 0.0
    %453 = vmatpush.msra.mxu0 %v433
    %454 = vmatmul.f32.gmra.mxu0 %v436
    %v455 = vpop.f32.mrf.mxu0
    %v456 = vadd.f32 0.0, %v455
    %457 = vdwg.mxu0
    %458 = vrot.lane.b32.xlu0 %v139, 56
    %v459 = vpop.permute.xlu0 %458
    %v462 = vsel %vm144, %v431, 0
    %464 = vmatpush.msra.mxu0 0.0
    %465 = vmatpush.msra.mxu0 0.0
    %466 = vmatpush.msra.mxu0 0.0
    %467 = vmatpush.msra.mxu0 0.0
    %468 = vmatpush.msra.mxu0 0.0
    %469 = vmatpush.msra.mxu0 0.0
    %470 = vmatpush.msra.mxu0 0.0
    %471 = vmatpush.msra.mxu0 0.0
    %472 = vmatpush.msra.mxu0 0.0
    %473 = vmatpush.msra.mxu0 0.0
    %474 = vmatpush.msra.mxu0 0.0
    %475 = vmatpush.msra.mxu0 0.0
    %476 = vmatpush.msra.mxu0 0.0
    %477 = vmatpush.msra.mxu0 0.0
    %478 = vmatpush.msra.mxu0 0.0
    %479 = vmatpush.msra.mxu0 %v459
    %480 = vmatmul.f32.gmra.mxu0 %v462
    %v481 = vpop.f32.mrf.mxu0
    %v482 = vadd.f32 0.0, %v481
    %483 = vdwg.mxu0
    %v484 = vld [vmem:[%s1 + $0x88] sm:$0xff]
    %v486 = vsel %vm144, %v456, 0
    %v489 = vsel %vm144, %v482, 0
    %491 = vmatpush.msra.mxu0 0.0
    %492 = vmatpush.msra.mxu0 0.0
    %493 = vmatpush.msra.mxu0 0.0
    %494 = vmatpush.msra.mxu0 0.0
    %495 = vmatpush.msra.mxu0 0.0
    %496 = vmatpush.msra.mxu0 0.0
    %497 = vmatpush.msra.mxu0 0.0
    %498 = vmatpush.msra.mxu0 0.0
    %499 = vmatpush.msra.mxu0 0.0
    %500 = vmatpush.msra.mxu0 0.0
    %501 = vmatpush.msra.mxu0 0.0
    %502 = vmatpush.msra.mxu0 0.0
    %503 = vmatpush.msra.mxu0 0.0
    %504 = vmatpush.msra.mxu0 0.0
    %505 = vmatpush.msra.mxu0 0.0
    %506 = vmatpush.msra.mxu0 %v484
    %507 = vmatmul.f32.gmra.mxu0 %v486
    %v508 = vpop.f32.mrf.mxu0
    %v509 = vadd.f32 0.0, %v508
    %510 = vmatmul.f32.gmra.mxu0 %v489
    %v511 = vpop.f32.mrf.mxu0
    %v512 = vadd.f32 0.0, %v511
    %513 = vdwg.mxu0
    %v514 = vadd.f32 %v326, %v509
    %v515 = vadd.f32 %v327, %v512
    %516 = vrot.lane.b32.xlu0 %v136, 112
    %v517 = vpop.permute.xlu0 %516
    %518 = vrot.lane.b32.xlu0 %v136, 80
    %v519 = vpop.permute.xlu0 %518
    %v520 = vsel %vm144, %v517, 0
    %v522 = vsel %vm144, %v519, 0
    %524 = vmatpush.xpose.msra.mxu0 0.0
    %525 = vmatpush.xpose.msra.mxu0 0.0
    %526 = vmatpush.xpose.msra.mxu0 0.0
    %527 = vmatpush.xpose.msra.mxu0 0.0
    %528 = vmatpush.xpose.msra.mxu0 0.0
    %529 = vmatpush.xpose.msra.mxu0 0.0
    %530 = vmatpush.xpose.msra.mxu0 0.0
    %531 = vmatpush.xpose.msra.mxu0 0.0
    %532 = vmatpush.xpose.msra.mxu0 0.0
    %533 = vmatpush.xpose.msra.mxu0 0.0
    %534 = vmatpush.xpose.msra.mxu0 0.0
    %535 = vmatpush.xpose.msra.mxu0 0.0
    %536 = vmatpush.xpose.msra.mxu0 0.0
    %537 = vmatpush.xpose.msra.mxu0 0.0
    %538 = vmatpush.xpose.msra.mxu0 0.0
    %539 = vmatpush.xpose.msra.mxu0 %v522
    %540 = vmatmul.f32.gmra.mxu0 %v520
    %v541 = vpop.f32.mrf.mxu0
    %v542 = vadd.f32 0.0, %v541
    %543 = vdwg.mxu0
    %544 = vrot.lane.b32.xlu0 %v139, 112
    %v545 = vpop.permute.xlu0 %544
    %546 = vrot.lane.b32.xlu0 %v139, 80
    %v547 = vpop.permute.xlu0 %546
    %v548 = vsel %vm144, %v545, 0
    %v550 = vsel %vm144, %v547, 0
    %552 = vmatpush.xpose.msra.mxu0 0.0
    %553 = vmatpush.xpose.msra.mxu0 0.0
    %554 = vmatpush.xpose.msra.mxu0 0.0
    %555 = vmatpush.xpose.msra.mxu0 0.0
    %556 = vmatpush.xpose.msra.mxu0 0.0
    %557 = vmatpush.xpose.msra.mxu0 0.0
    %558 = vmatpush.xpose.msra.mxu0 0.0
    %559 = vmatpush.xpose.msra.mxu0 0.0
    %560 = vmatpush.xpose.msra.mxu0 0.0
    %561 = vmatpush.xpose.msra.mxu0 0.0
    %562 = vmatpush.xpose.msra.mxu0 0.0
    %563 = vmatpush.xpose.msra.mxu0 0.0
    %564 = vmatpush.xpose.msra.mxu0 0.0
    %565 = vmatpush.xpose.msra.mxu0 0.0
    %566 = vmatpush.xpose.msra.mxu0 0.0
    %567 = vmatpush.xpose.msra.mxu0 %v550
    %568 = vmatmul.f32.gmra.mxu0 %v548
    %v569 = vpop.f32.mrf.mxu0
    %v570 = vadd.f32 0.0, %v569
    %571 = vdwg.mxu0
    %v572 = vsel %vm144, %v542, -inf
    %573 = vmax.xlane.f32.xlu0 %v572
    %v574 = vpop.xlane.xlu0 %573
    %v575 = vsel %vm144, %v570, -inf
    %576 = vmax.xlane.f32.xlu0 %v575
    %v577 = vpop.xlane.xlu0 %576
    %v578 = vsub.f32 %v542, %v574
    %v579 = vsub.f32 %v570, %v577
    %v580 = vmul.f32 %v578, 1.442695
    %v581 = vpow.pop %v580
    %v582 = vmul.f32 %v579, 1.442695
    %v583 = vpow.pop %v582
    %v584 = vsel %vm144, %v581, 0.0
    %585 = vadd.xlane.f32.xlu0 %v584
    %v586 = vpop.xlane.xlu0 %585
    %v587 = vsel %vm144, %v583, 0.0
    %588 = vadd.xlane.f32.xlu0 %v587
    %v589 = vpop.xlane.xlu0 %588
    %v590 = vrcp.pop %v586
    %v591 = vmul.f32 %v586, %v590
    %v592 = vsub.f32 1.0, %v591
    %v593 = vmul.f32 %v590, %v592
    %v594 = vadd.f32 %v590, %v593
    %vm595 = vweird.f32 %v586
    %vm596 = vweird.f32 %v590
    %vm597 = vmor %vm595, %vm596
    %v598 = vsel %vm597, %v590, %v594
    %v599 = vand.u32 2147483647, %v586
    %vm600 = vcmp.eq.f32.partialorder %v599, 8.507059e+37
    %v601 = vand.u32 %v586, 2147483648
    %v602 = vor.u32 1.1754944e-38, %v601
    %v603 = vsel %vm600, %v602, %v598
    %v604 = vrcp.pop %v589
    %v605 = vmul.f32 %v589, %v604
    %v606 = vsub.f32 1.0, %v605
    %v607 = vmul.f32 %v604, %v606
    %v608 = vadd.f32 %v604, %v607
    %vm609 = vweird.f32 %v589
    %vm610 = vweird.f32 %v604
    %vm611 = vmor %vm609, %vm610
    %v612 = vsel %vm611, %v604, %v608
    %v613 = vand.u32 2147483647, %v589
    %vm614 = vcmp.eq.f32.partialorder %v613, 8.507059e+37
    %v615 = vand.u32 %v589, 2147483648
    %v616 = vor.u32 1.1754944e-38, %v615
    %v617 = vsel %vm614, %v616, %v612
    %v618 = vmul.f32 %v581, %v603
    %v619 = vmul.f32 %v583, %v617
    %620 = vrot.lane.b32.xlu0 %v136, 48
    %v621 = vpop.permute.xlu0 %620
    %v624 = vsel %vm144, %v618, 0
    %626 = vmatpush.msra.mxu0 0.0
    %627 = vmatpush.msra.mxu0 0.0
    %628 = vmatpush.msra.mxu0 0.0
    %629 = vmatpush.msra.mxu0 0.0
    %630 = vmatpush.msra.mxu0 0.0
    %631 = vmatpush.msra.mxu0 0.0
    %632 = vmatpush.msra.mxu0 0.0
    %633 = vmatpush.msra.mxu0 0.0
    %634 = vmatpush.msra.mxu0 0.0
    %635 = vmatpush.msra.mxu0 0.0
    %636 = vmatpush.msra.mxu0 0.0
    %637 = vmatpush.msra.mxu0 0.0
    %638 = vmatpush.msra.mxu0 0.0
    %639 = vmatpush.msra.mxu0 0.0
    %640 = vmatpush.msra.mxu0 0.0
    %641 = vmatpush.msra.mxu0 %v621
    %642 = vmatmul.f32.gmra.mxu0 %v624
    %v643 = vpop.f32.mrf.mxu0
    %v644 = vadd.f32 0.0, %v643
    %645 = vdwg.mxu0
    %646 = vrot.lane.b32.xlu0 %v139, 48
    %v647 = vpop.permute.xlu0 %646
    %v650 = vsel %vm144, %v619, 0
    %652 = vmatpush.msra.mxu0 0.0
    %653 = vmatpush.msra.mxu0 0.0
    %654 = vmatpush.msra.mxu0 0.0
    %655 = vmatpush.msra.mxu0 0.0
    %656 = vmatpush.msra.mxu0 0.0
    %657 = vmatpush.msra.mxu0 0.0
    %658 = vmatpush.msra.mxu0 0.0
    %659 = vmatpush.msra.mxu0 0.0
    %660 = vmatpush.msra.mxu0 0.0
    %661 = vmatpush.msra.mxu0 0.0
    %662 = vmatpush.msra.mxu0 0.0
    %663 = vmatpush.msra.mxu0 0.0
    %664 = vmatpush.msra.mxu0 0.0
    %665 = vmatpush.msra.mxu0 0.0
    %666 = vmatpush.msra.mxu0 0.0
    %667 = vmatpush.msra.mxu0 %v647
    %668 = vmatmul.f32.gmra.mxu0 %v650
    %v669 = vpop.f32.mrf.mxu0
    %v670 = vadd.f32 0.0, %v669
    %671 = vdwg.mxu0
    %v672 = vld [vmem:[%s1 + $0x90] sm:$0xff]
    %v674 = vsel %vm144, %v644, 0
    %v677 = vsel %vm144, %v670, 0
    %679 = vmatpush.msra.mxu0 0.0
    %680 = vmatpush.msra.mxu0 0.0
    %681 = vmatpush.msra.mxu0 0.0
    %682 = vmatpush.msra.mxu0 0.0
    %683 = vmatpush.msra.mxu0 0.0
    %684 = vmatpush.msra.mxu0 0.0
    %685 = vmatpush.msra.mxu0 0.0
    %686 = vmatpush.msra.mxu0 0.0
    %687 = vmatpush.msra.mxu0 0.0
    %688 = vmatpush.msra.mxu0 0.0
    %689 = vmatpush.msra.mxu0 0.0
    %690 = vmatpush.msra.mxu0 0.0
    %691 = vmatpush.msra.mxu0 0.0
    %692 = vmatpush.msra.mxu0 0.0
    %693 = vmatpush.msra.mxu0 0.0
    %694 = vmatpush.msra.mxu0 %v672
    %695 = vmatmul.f32.gmra.mxu0 %v674
    %v696 = vpop.f32.mrf.mxu0
    %v697 = vadd.f32 0.0, %v696
    %698 = vmatmul.f32.gmra.mxu0 %v677
    %v699 = vpop.f32.mrf.mxu0
    %v700 = vadd.f32 0.0, %v699
    %701 = vdwg.mxu0
    %v702 = vadd.f32 %v514, %v697
    %v703 = vadd.f32 %v515, %v700
    %704 = vrot.lane.b32.xlu0 %v136, 104
    %v705 = vpop.permute.xlu0 %704
    %706 = vrot.lane.b32.xlu0 %v136, 72
    %v707 = vpop.permute.xlu0 %706
    %v708 = vsel %vm144, %v705, 0
    %v710 = vsel %vm144, %v707, 0
    %712 = vmatpush.xpose.msra.mxu0 0.0
    %713 = vmatpush.xpose.msra.mxu0 0.0
    %714 = vmatpush.xpose.msra.mxu0 0.0
    %715 = vmatpush.xpose.msra.mxu0 0.0
    %716 = vmatpush.xpose.msra.mxu0 0.0
    %717 = vmatpush.xpose.msra.mxu0 0.0
    %718 = vmatpush.xpose.msra.mxu0 0.0
    %719 = vmatpush.xpose.msra.mxu0 0.0
    %720 = vmatpush.xpose.msra.mxu0 0.0
    %721 = vmatpush.xpose.msra.mxu0 0.0
    %722 = vmatpush.xpose.msra.mxu0 0.0
    %723 = vmatpush.xpose.msra.mxu0 0.0
    %724 = vmatpush.xpose.msra.mxu0 0.0
    %725 = vmatpush.xpose.msra.mxu0 0.0
    %726 = vmatpush.xpose.msra.mxu0 0.0
    %727 = vmatpush.xpose.msra.mxu0 %v710
    %728 = vmatmul.f32.gmra.mxu0 %v708
    %v729 = vpop.f32.mrf.mxu0
    %v730 = vadd.f32 0.0, %v729
    %731 = vdwg.mxu0
    %732 = vrot.lane.b32.xlu0 %v139, 104
    %v733 = vpop.permute.xlu0 %732
    %734 = vrot.lane.b32.xlu0 %v139, 72
    %v735 = vpop.permute.xlu0 %734
    %v736 = vsel %vm144, %v733, 0
    %v738 = vsel %vm144, %v735, 0
    %740 = vmatpush.xpose.msra.mxu0 0.0
    %741 = vmatpush.xpose.msra.mxu0 0.0
    %742 = vmatpush.xpose.msra.mxu0 0.0
    %743 = vmatpush.xpose.msra.mxu0 0.0
    %744 = vmatpush.xpose.msra.mxu0 0.0
    %745 = vmatpush.xpose.msra.mxu0 0.0
    %746 = vmatpush.xpose.msra.mxu0 0.0
    %747 = vmatpush.xpose.msra.mxu0 0.0
    %748 = vmatpush.xpose.msra.mxu0 0.0
    %749 = vmatpush.xpose.msra.mxu0 0.0
    %750 = vmatpush.xpose.msra.mxu0 0.0
    %751 = vmatpush.xpose.msra.mxu0 0.0
    %752 = vmatpush.xpose.msra.mxu0 0.0
    %753 = vmatpush.xpose.msra.mxu0 0.0
    %754 = vmatpush.xpose.msra.mxu0 0.0
    %755 = vmatpush.xpose.msra.mxu0 %v738
    %756 = vmatmul.f32.gmra.mxu0 %v736
    %v757 = vpop.f32.mrf.mxu0
    %v758 = vadd.f32 0.0, %v757
    %759 = vdwg.mxu0
    %v760 = vsel %vm144, %v730, -inf
    %761 = vmax.xlane.f32.xlu0 %v760
    %v762 = vpop.xlane.xlu0 %761
    %v763 = vsel %vm144, %v758, -inf
    %764 = vmax.xlane.f32.xlu0 %v763
    %v765 = vpop.xlane.xlu0 %764
    %v766 = vsub.f32 %v730, %v762
    %v767 = vsub.f32 %v758, %v765
    %v768 = vmul.f32 %v766, 1.442695
    %v769 = vpow.pop %v768
    %v770 = vmul.f32 %v767, 1.442695
    %v771 = vpow.pop %v770
    %v772 = vsel %vm144, %v769, 0.0
    %773 = vadd.xlane.f32.xlu0 %v772
    %v774 = vpop.xlane.xlu0 %773
    %v775 = vsel %vm144, %v771, 0.0
    %776 = vadd.xlane.f32.xlu0 %v775
    %v777 = vpop.xlane.xlu0 %776
    %v778 = vrcp.pop %v774
    %v779 = vmul.f32 %v774, %v778
    %v780 = vsub.f32 1.0, %v779
    %v781 = vmul.f32 %v778, %v780
    %v782 = vadd.f32 %v778, %v781
    %vm783 = vweird.f32 %v774
    %vm784 = vweird.f32 %v778
    %vm785 = vmor %vm783, %vm784
    %v786 = vsel %vm785, %v778, %v782
    %v787 = vand.u32 2147483647, %v774
    %vm788 = vcmp.eq.f32.partialorder %v787, 8.507059e+37
    %v789 = vand.u32 %v774, 2147483648
    %v790 = vor.u32 1.1754944e-38, %v789
    %v791 = vsel %vm788, %v790, %v786
    %v792 = vrcp.pop %v777
    %v793 = vmul.f32 %v777, %v792
    %v794 = vsub.f32 1.0, %v793
    %v795 = vmul.f32 %v792, %v794
    %v796 = vadd.f32 %v792, %v795
    %vm797 = vweird.f32 %v777
    %vm798 = vweird.f32 %v792
    %vm799 = vmor %vm797, %vm798
    %v800 = vsel %vm799, %v792, %v796
    %v801 = vand.u32 2147483647, %v777
    %vm802 = vcmp.eq.f32.partialorder %v801, 8.507059e+37
    %v803 = vand.u32 %v777, 2147483648
    %v804 = vor.u32 1.1754944e-38, %v803
    %v805 = vsel %vm802, %v804, %v800
    %v806 = vmul.f32 %v769, %v791
    %v807 = vmul.f32 %v771, %v805
    %808 = vrot.lane.b32.xlu0 %v136, 40
    %v809 = vpop.permute.xlu0 %808
    %v812 = vsel %vm144, %v806, 0
    %814 = vmatpush.msra.mxu0 0.0
    %815 = vmatpush.msra.mxu0 0.0
    %816 = vmatpush.msra.mxu0 0.0
    %817 = vmatpush.msra.mxu0 0.0
    %818 = vmatpush.msra.mxu0 0.0
    %819 = vmatpush.msra.mxu0 0.0
    %820 = vmatpush.msra.mxu0 0.0
    %821 = vmatpush.msra.mxu0 0.0
    %822 = vmatpush.msra.mxu0 0.0
    %823 = vmatpush.msra.mxu0 0.0
    %824 = vmatpush.msra.mxu0 0.0
    %825 = vmatpush.msra.mxu0 0.0
    %826 = vmatpush.msra.mxu0 0.0
    %827 = vmatpush.msra.mxu0 0.0
    %828 = vmatpush.msra.mxu0 0.0
    %829 = vmatpush.msra.mxu0 %v809
    %830 = vmatmul.f32.gmra.mxu0 %v812
    %v831 = vpop.f32.mrf.mxu0
    %v832 = vadd.f32 0.0, %v831
    %833 = vdwg.mxu0
    %834 = vrot.lane.b32.xlu0 %v139, 40
    %v835 = vpop.permute.xlu0 %834
    %v838 = vsel %vm144, %v807, 0
    %840 = vmatpush.msra.mxu0 0.0
    %841 = vmatpush.msra.mxu0 0.0
    %842 = vmatpush.msra.mxu0 0.0
    %843 = vmatpush.msra.mxu0 0.0
    %844 = vmatpush.msra.mxu0 0.0
    %845 = vmatpush.msra.mxu0 0.0
    %846 = vmatpush.msra.mxu0 0.0
    %847 = vmatpush.msra.mxu0 0.0
    %848 = vmatpush.msra.mxu0 0.0
    %849 = vmatpush.msra.mxu0 0.0
    %850 = vmatpush.msra.mxu0 0.0
    %851 = vmatpush.msra.mxu0 0.0
    %852 = vmatpush.msra.mxu0 0.0
    %853 = vmatpush.msra.mxu0 0.0
    %854 = vmatpush.msra.mxu0 0.0
    %855 = vmatpush.msra.mxu0 %v835
    %856 = vmatmul.f32.gmra.mxu0 %v838
    %v857 = vpop.f32.mrf.mxu0
    %v858 = vadd.f32 0.0, %v857
    %859 = vdwg.mxu0
    %v860 = vld [vmem:[%s1 + $0x98] sm:$0xff]
    %v862 = vsel %vm144, %v832, 0
    %v865 = vsel %vm144, %v858, 0
    %867 = vmatpush.msra.mxu0 0.0
    %868 = vmatpush.msra.mxu0 0.0
    %869 = vmatpush.msra.mxu0 0.0
    %870 = vmatpush.msra.mxu0 0.0
    %871 = vmatpush.msra.mxu0 0.0
    %872 = vmatpush.msra.mxu0 0.0
    %873 = vmatpush.msra.mxu0 0.0
    %874 = vmatpush.msra.mxu0 0.0
    %875 = vmatpush.msra.mxu0 0.0
    %876 = vmatpush.msra.mxu0 0.0
    %877 = vmatpush.msra.mxu0 0.0
    %878 = vmatpush.msra.mxu0 0.0
    %879 = vmatpush.msra.mxu0 0.0
    %880 = vmatpush.msra.mxu0 0.0
    %881 = vmatpush.msra.mxu0 0.0
    %882 = vmatpush.msra.mxu0 %v860
    %883 = vmatmul.f32.gmra.mxu0 %v862
    %v884 = vpop.f32.mrf.mxu0
    %v885 = vadd.f32 0.0, %v884
    %886 = vmatmul.f32.gmra.mxu0 %v865
    %v887 = vpop.f32.mrf.mxu0
    %v888 = vadd.f32 0.0, %v887
    %889 = vdwg.mxu0
    %v890 = vadd.f32 %v702, %v885
    %v891 = vadd.f32 %v703, %v888
    %v892 = vadd.f32 %v22, %v890
    %v893 = vadd.f32 %v23, %v891
    %v894 = vsel %vm56, %v892, 0.0
    %895 = vadd.xlane.f32.xlu0 %v894
    %v896 = vpop.xlane.xlu0 %895
    %v897 = vsel %vm56, %v893, 0.0
    %898 = vadd.xlane.f32.xlu0 %v897
    %v899 = vpop.xlane.xlu0 %898
    %v900 = vmul.f32 %v896, %v69
    %v901 = vmul.f32 %v899, %v69
    %v902 = vsub.f32 %v892, %v900
    %v903 = vsub.f32 %v893, %v901
    %v904 = vmul.f32 %v902, %v902
    %v905 = vmul.f32 %v903, %v903
    %v906 = vsel %vm56, %v904, 0.0
    %907 = vadd.xlane.f32.xlu0 %v906
    %v908 = vpop.xlane.xlu0 %907
    %v909 = vsel %vm56, %v905, 0.0
    %910 = vadd.xlane.f32.xlu0 %v909
    %v911 = vpop.xlane.xlu0 %910
    %v912 = vmul.f32 %v908, %v69
    %v913 = vmul.f32 %v911, %v69
    %v914 = vadd.f32 %v912, 1e-05
    %v915 = vadd.f32 %v913, 1e-05
    %v916 = vrsqrt.pop %v914
    %v917 = vmul.f32 %v916, %v914
    %v918 = vmul.f32 %v917, %v916
    %v919 = vmul.f32 0.5, %v918
    %v920 = vsub.f32 1.5, %v919
    %v921 = vmul.f32 %v916, %v920
    %vm922 = vweird.f32 %v914
    %vm923 = vweird.f32 %v916
    %vm924 = vmor %vm922, %vm923
    %v925 = vsel %vm924, %v916, %v921
    %v926 = vrsqrt.pop %v915
    %v927 = vmul.f32 %v926, %v915
    %v928 = vmul.f32 %v927, %v926
    %v929 = vmul.f32 0.5, %v928
    %v930 = vsub.f32 1.5, %v929
    %v931 = vmul.f32 %v926, %v930
    %vm932 = vweird.f32 %v915
    %vm933 = vweird.f32 %v926
    %vm934 = vmor %vm932, %vm933
    %v935 = vsel %vm934, %v926, %v931
    %v936 = vmul.f32 %v902, %v925
    %v937 = vmul.f32 %v903, %v935
    %v938 = vmul.f32 %v936, %v36
    %v939 = vmul.f32 %v937, %v37
    %v940 = vadd.f32 %v938, %v38
    %v941 = vadd.f32 %v939, %v39
    %v943 = vsel %vm56, %v940, 0
    %v946 = vsel %vm56, %v941, 0
    %948 = vmatpush.msra.mxu0 0.0
    %949 = vmatpush.msra.mxu0 0.0
    %950 = vmatpush.msra.mxu0 0.0
    %951 = vmatpush.msra.mxu0 0.0
    %952 = vmatpush.msra.mxu0 0.0
    %953 = vmatpush.msra.mxu0 0.0
    %954 = vmatpush.msra.mxu0 0.0
    %955 = vmatpush.msra.mxu0 0.0
    %956 = vmatpush.msra.mxu0 0.0
    %957 = vmatpush.msra.mxu0 0.0
    %958 = vmatpush.msra.mxu0 0.0
    %959 = vmatpush.msra.mxu0 0.0
    %960 = vmatpush.msra.mxu0 %v47
    %961 = vmatpush.msra.mxu0 %v46
    %962 = vmatpush.msra.mxu0 %v45
    %963 = vmatpush.msra.mxu0 %v44
    %964 = vmatmul.f32.gmra.mxu0 %v943
    %v965 = vpop.f32.mrf.mxu0
    %v966 = vadd.f32 %v26, %v965
    %967 = vmatmul.f32.gmra.mxu0 %v946
    %v968 = vpop.f32.mrf.mxu0
    %v969 = vadd.f32 %v27, %v968
    %970 = vdwg.mxu0
    %v971 = vmax.f32 %v966, 0.0
    %v972 = vmax.f32 %v969, 0.0
    %vm973 = vcmask 523264
    %v975 = vsel %vm973, %v971, 0
    %v978 = vsel %vm973, %v972, 0
    %980 = vmatpush.msra.mxu0 0.0
    %981 = vmatpush.msra.mxu0 0.0
    %982 = vmatpush.msra.mxu0 0.0
    %983 = vmatpush.msra.mxu0 0.0
    %984 = vmatpush.msra.mxu0 0.0
    %985 = vmatpush.msra.mxu0 0.0
    %986 = vmatpush.msra.mxu0 0.0
    %987 = vmatpush.msra.mxu0 0.0
    %988 = vmatpush.msra.mxu0 %v55
    %989 = vmatpush.msra.mxu0 %v54
    %990 = vmatpush.msra.mxu0 %v53
    %991 = vmatpush.msra.mxu0 %v52
    %992 = vmatpush.msra.mxu0 %v51
    %993 = vmatpush.msra.mxu0 %v50
    %994 = vmatpush.msra.mxu0 %v49
    %995 = vmatpush.msra.mxu0 %v48
    %996 = vmatmul.f32.gmra.mxu0 %v975
    %v997 = vpop.f32.mrf.mxu0
    %v998 = vadd.f32 0.0, %v997
    %999 = vmatmul.f32.gmra.mxu0 %v978
    %v1000 = vpop.f32.mrf.mxu0
    %v1001 = vadd.f32 0.0, %v1000
    %1002 = vdwg.mxu0
    %v1003 = vadd.f32 %v892, %v998
    %v1004 = vadd.f32 %v893, %v1001
    %v1005 = vadd.f32 %v1003, %v30
    %v1006 = vadd.f32 %v1004, %v31
    %s1007 = scalar_lea.vmem %s2, 128
    %v1008 = vld [vmem:[%s1007] sm:$0xff]
    %v1009 = vld [vmem:[%s1007 + $0x8] sm:$0xff]
    %v1010 = vld [vmem:[%s1007 + $0x10] sm:$0xff]
    %v1011 = vld [vmem:[%s1007 + $0x18] sm:$0xff]
    %v1012 = vld [vmem:[%s1007 + $0x20] sm:$0xff]
    %v1013 = vld [vmem:[%s1007 + $0x28] sm:$0xff]
    %v1014 = vld [vmem:[%s1007 + $0x30] sm:$0xff]
    %v1015 = vld [vmem:[%s1007 + $0x38] sm:$0xff]
    %v1016 = vld [vmem:[%s1007 + $0x40] sm:$0xff]
    %v1017 = vld [vmem:[%s1007 + $0x48] sm:$0xff]
    %v1018 = vld [vmem:[%s1007 + $0x50] sm:$0xff]
    %v1019 = vld [vmem:[%s1007 + $0x58] sm:$0xff]
    %v1020 = vld [vmem:[%s1007 + $0x60] sm:$0xff]
    %v1021 = vld [vmem:[%s1007 + $0x68] sm:$0xff]
    %v1022 = vld [vmem:[%s1007 + $0x70] sm:$0xff]
    %v1023 = vld [vmem:[%s1007 + $0x78] sm:$0xff]
    %s1024 = scalar_lea.vmem %s1, 160
    %v1025 = vld [vmem:[%s1024] sm:$0xff]
    %v1026 = vld [vmem:[%s1024 + $0x8] sm:$0xff]
    %v1027 = vld [vmem:[%s1024 + $0x10] sm:$0xff]
    %v1028 = vld [vmem:[%s1024 + $0x18] sm:$0xff]
    %v1029 = vld [vmem:[%s1024 + $0x20] sm:$0xff]
    %v1030 = vld [vmem:[%s1024 + $0x28] sm:$0xff]
    %v1031 = vld [vmem:[%s1024 + $0x30] sm:$0xff]
    %v1032 = vld [vmem:[%s1024 + $0x38] sm:$0xff]
    %v1033 = vld [vmem:[%s1024 + $0x40] sm:$0xff]
    %v1034 = vld [vmem:[%s1024 + $0x48] sm:$0xff]
    %v1035 = vld [vmem:[%s1024 + $0x50] sm:$0xff]
    %v1036 = vld [vmem:[%s1024 + $0x58] sm:$0xff]
    %v1037 = vld [vmem:[%s1024 + $0x60] sm:$0xff]
    %v1038 = vld [vmem:[%s1024 + $0x68] sm:$0xff]
    %v1039 = vld [vmem:[%s1024 + $0x70] sm:$0xff]
    %v1040 = vld [vmem:[%s1024 + $0x78] sm:$0xff]
    %v1041 = vsel %vm56, %v1005, 0.0
    %1042 = vadd.xlane.f32.xlu0 %v1041
    %v1043 = vpop.xlane.xlu0 %1042
    %v1044 = vsel %vm56, %v1006, 0.0
    %1045 = vadd.xlane.f32.xlu0 %v1044
    %v1046 = vpop.xlane.xlu0 %1045
    %v1047 = vmul.f32 %v1043, %v69
    %v1048 = vmul.f32 %v1046, %v69
    %v1049 = vsub.f32 %v1005, %v1047
    %v1050 = vsub.f32 %v1006, %v1048
    %v1051 = vmul.f32 %v1049, %v1049
    %v1052 = vmul.f32 %v1050, %v1050
    %v1053 = vsel %vm56, %v1051, 0.0
    %1054 = vadd.xlane.f32.xlu0 %v1053
    %v1055 = vpop.xlane.xlu0 %1054
    %v1056 = vsel %vm56, %v1052, 0.0
    %1057 = vadd.xlane.f32.xlu0 %v1056
    %v1058 = vpop.xlane.xlu0 %1057
    %v1059 = vmul.f32 %v1055, %v69
    %v1060 = vmul.f32 %v1058, %v69
    %v1061 = vadd.f32 %v1059, 1e-05
    %v1062 = vadd.f32 %v1060, 1e-05
    %v1063 = vrsqrt.pop %v1061
    %v1064 = vmul.f32 %v1063, %v1061
    %v1065 = vmul.f32 %v1064, %v1063
    %v1066 = vmul.f32 0.5, %v1065
    %v1067 = vsub.f32 1.5, %v1066
    %v1068 = vmul.f32 %v1063, %v1067
    %vm1069 = vweird.f32 %v1061
    %vm1070 = vweird.f32 %v1063
    %vm1071 = vmor %vm1069, %vm1070
    %v1072 = vsel %vm1071, %v1063, %v1068
    %v1073 = vrsqrt.pop %v1062
    %v1074 = vmul.f32 %v1073, %v1062
    %v1075 = vmul.f32 %v1074, %v1073
    %v1076 = vmul.f32 0.5, %v1075
    %v1077 = vsub.f32 1.5, %v1076
    %v1078 = vmul.f32 %v1073, %v1077
    %vm1079 = vweird.f32 %v1062
    %vm1080 = vweird.f32 %v1073
    %vm1081 = vmor %vm1079, %vm1080
    %v1082 = vsel %vm1081, %v1073, %v1078
    %v1083 = vmul.f32 %v1049, %v1072
    %v1084 = vmul.f32 %v1050, %v1082
    %v1085 = vmul.f32 %v1083, %v1016
    %v1086 = vmul.f32 %v1084, %v1017
    %v1087 = vadd.f32 %v1085, %v1018
    %v1088 = vadd.f32 %v1086, %v1019
    %v1090 = vsel %vm56, %v1087, 0
    %v1093 = vsel %vm56, %v1088, 0
    %1095 = vmatpush.msra.mxu0 0.0
    %1096 = vmatpush.msra.mxu0 0.0
    %1097 = vmatpush.msra.mxu0 0.0
    %1098 = vmatpush.msra.mxu0 0.0
    %1099 = vmatpush.msra.mxu0 0.0
    %1100 = vmatpush.msra.mxu0 0.0
    %1101 = vmatpush.msra.mxu0 0.0
    %1102 = vmatpush.msra.mxu0 0.0
    %1103 = vmatpush.msra.mxu0 0.0
    %1104 = vmatpush.msra.mxu0 0.0
    %1105 = vmatpush.msra.mxu0 0.0
    %1106 = vmatpush.msra.mxu0 0.0
    %1107 = vmatpush.msra.mxu0 %v1028
    %1108 = vmatpush.msra.mxu0 %v1027
    %1109 = vmatpush.msra.mxu0 %v1026
    %1110 = vmatpush.msra.mxu0 %v1025
    %1111 = vmatmul.f32.gmra.mxu0 %v1090
    %v1112 = vpop.f32.mrf.mxu0
    %v1113 = vadd.f32 %v1008, %v1112
    %1114 = vmatmul.f32.gmra.mxu0 %v1093
    %v1115 = vpop.f32.mrf.mxu0
    %v1116 = vadd.f32 %v1009, %v1115
    %1117 = vdwg.mxu0
    %1119 = vrot.lane.b32.xlu0 %v1113, 96
    %v1120 = vpop.permute.xlu0 %1119
    %v1121 = vsel %vm144, %v1113, 0
    %v1123 = vsel %vm144, %v1120, 0
    %1125 = vmatpush.xpose.msra.mxu0 0.0
    %1126 = vmatpush.xpose.msra.mxu0 0.0
    %1127 = vmatpush.xpose.msra.mxu0 0.0
    %1128 = vmatpush.xpose.msra.mxu0 0.0
    %1129 = vmatpush.xpose.msra.mxu0 0.0
    %1130 = vmatpush.xpose.msra.mxu0 0.0
    %1131 = vmatpush.xpose.msra.mxu0 0.0
    %1132 = vmatpush.xpose.msra.mxu0 0.0
    %1133 = vmatpush.xpose.msra.mxu0 0.0
    %1134 = vmatpush.xpose.msra.mxu0 0.0
    %1135 = vmatpush.xpose.msra.mxu0 0.0
    %1136 = vmatpush.xpose.msra.mxu0 0.0
    %1137 = vmatpush.xpose.msra.mxu0 0.0
    %1138 = vmatpush.xpose.msra.mxu0 0.0
    %1139 = vmatpush.xpose.msra.mxu0 0.0
    %1140 = vmatpush.xpose.msra.mxu0 %v1123
    %1141 = vmatmul.f32.gmra.mxu0 %v1121
    %v1142 = vpop.f32.mrf.mxu0
    %v1143 = vadd.f32 0.0, %v1142
    %1144 = vdwg.mxu0
    %1146 = vrot.lane.b32.xlu0 %v1116, 96
    %v1147 = vpop.permute.xlu0 %1146
    %v1148 = vsel %vm144, %v1116, 0
    %v1150 = vsel %vm144, %v1147, 0
    %1152 = vmatpush.xpose.msra.mxu0 0.0
    %1153 = vmatpush.xpose.msra.mxu0 0.0
    %1154 = vmatpush.xpose.msra.mxu0 0.0
    %1155 = vmatpush.xpose.msra.mxu0 0.0
    %1156 = vmatpush.xpose.msra.mxu0 0.0
    %1157 = vmatpush.xpose.msra.mxu0 0.0
    %1158 = vmatpush.xpose.msra.mxu0 0.0
    %1159 = vmatpush.xpose.msra.mxu0 0.0
    %1160 = vmatpush.xpose.msra.mxu0 0.0
    %1161 = vmatpush.xpose.msra.mxu0 0.0
    %1162 = vmatpush.xpose.msra.mxu0 0.0
    %1163 = vmatpush.xpose.msra.mxu0 0.0
    %1164 = vmatpush.xpose.msra.mxu0 0.0
    %1165 = vmatpush.xpose.msra.mxu0 0.0
    %1166 = vmatpush.xpose.msra.mxu0 0.0
    %1167 = vmatpush.xpose.msra.mxu0 %v1150
    %1168 = vmatmul.f32.gmra.mxu0 %v1148
    %v1169 = vpop.f32.mrf.mxu0
    %v1170 = vadd.f32 0.0, %v1169
    %1171 = vdwg.mxu0
    %v1172 = vsel %vm144, %v1143, -inf
    %1173 = vmax.xlane.f32.xlu0 %v1172
    %v1174 = vpop.xlane.xlu0 %1173
    %v1175 = vsel %vm144, %v1170, -inf
    %1176 = vmax.xlane.f32.xlu0 %v1175
    %v1177 = vpop.xlane.xlu0 %1176
    %v1178 = vsub.f32 %v1143, %v1174
    %v1179 = vsub.f32 %v1170, %v1177
    %v1180 = vmul.f32 %v1178, 1.442695
    %v1181 = vpow.pop %v1180
    %v1182 = vmul.f32 %v1179, 1.442695
    %v1183 = vpow.pop %v1182
    %v1184 = vsel %vm144, %v1181, 0.0
    %1185 = vadd.xlane.f32.xlu0 %v1184
    %v1186 = vpop.xlane.xlu0 %1185
    %v1187 = vsel %vm144, %v1183, 0.0
    %1188 = vadd.xlane.f32.xlu0 %v1187
    %v1189 = vpop.xlane.xlu0 %1188
    %v1190 = vrcp.pop %v1186
    %v1191 = vmul.f32 %v1186, %v1190
    %v1192 = vsub.f32 1.0, %v1191
    %v1193 = vmul.f32 %v1190, %v1192
    %v1194 = vadd.f32 %v1190, %v1193
    %vm1195 = vweird.f32 %v1186
    %vm1196 = vweird.f32 %v1190
    %vm1197 = vmor %vm1195, %vm1196
    %v1198 = vsel %vm1197, %v1190, %v1194
    %v1199 = vand.u32 2147483647, %v1186
    %vm1200 = vcmp.eq.f32.partialorder %v1199, 8.507059e+37
    %v1201 = vand.u32 %v1186, 2147483648
    %v1202 = vor.u32 1.1754944e-38, %v1201
    %v1203 = vsel %vm1200, %v1202, %v1198
    %v1204 = vrcp.pop %v1189
    %v1205 = vmul.f32 %v1189, %v1204
    %v1206 = vsub.f32 1.0, %v1205
    %v1207 = vmul.f32 %v1204, %v1206
    %v1208 = vadd.f32 %v1204, %v1207
    %vm1209 = vweird.f32 %v1189
    %vm1210 = vweird.f32 %v1204
    %vm1211 = vmor %vm1209, %vm1210
    %v1212 = vsel %vm1211, %v1204, %v1208
    %v1213 = vand.u32 2147483647, %v1189
    %vm1214 = vcmp.eq.f32.partialorder %v1213, 8.507059e+37
    %v1215 = vand.u32 %v1189, 2147483648
    %v1216 = vor.u32 1.1754944e-38, %v1215
    %v1217 = vsel %vm1214, %v1216, %v1212
    %v1218 = vmul.f32 %v1181, %v1203
    %v1219 = vmul.f32 %v1183, %v1217
    %1220 = vrot.lane.b32.xlu0 %v1113, 64
    %v1221 = vpop.permute.xlu0 %1220
    %v1224 = vsel %vm144, %v1218, 0
    %1226 = vmatpush.msra.mxu0 0.0
    %1227 = vmatpush.msra.mxu0 0.0
    %1228 = vmatpush.msra.mxu0 0.0
    %1229 = vmatpush.msra.mxu0 0.0
    %1230 = vmatpush.msra.mxu0 0.0
    %1231 = vmatpush.msra.mxu0 0.0
    %1232 = vmatpush.msra.mxu0 0.0
    %1233 = vmatpush.msra.mxu0 0.0
    %1234 = vmatpush.msra.mxu0 0.0
    %1235 = vmatpush.msra.mxu0 0.0
    %1236 = vmatpush.msra.mxu0 0.0
    %1237 = vmatpush.msra.mxu0 0.0
    %1238 = vmatpush.msra.mxu0 0.0
    %1239 = vmatpush.msra.mxu0 0.0
    %1240 = vmatpush.msra.mxu0 0.0
    %1241 = vmatpush.msra.mxu0 %v1221
    %1242 = vmatmul.f32.gmra.mxu0 %v1224
    %v1243 = vpop.f32.mrf.mxu0
    %v1244 = vadd.f32 0.0, %v1243
    %1245 = vdwg.mxu0
    %1246 = vrot.lane.b32.xlu0 %v1116, 64
    %v1247 = vpop.permute.xlu0 %1246
    %v1250 = vsel %vm144, %v1219, 0
    %1252 = vmatpush.msra.mxu0 0.0
    %1253 = vmatpush.msra.mxu0 0.0
    %1254 = vmatpush.msra.mxu0 0.0
    %1255 = vmatpush.msra.mxu0 0.0
    %1256 = vmatpush.msra.mxu0 0.0
    %1257 = vmatpush.msra.mxu0 0.0
    %1258 = vmatpush.msra.mxu0 0.0
    %1259 = vmatpush.msra.mxu0 0.0
    %1260 = vmatpush.msra.mxu0 0.0
    %1261 = vmatpush.msra.mxu0 0.0
    %1262 = vmatpush.msra.mxu0 0.0
    %1263 = vmatpush.msra.mxu0 0.0
    %1264 = vmatpush.msra.mxu0 0.0
    %1265 = vmatpush.msra.mxu0 0.0
    %1266 = vmatpush.msra.mxu0 0.0
    %1267 = vmatpush.msra.mxu0 %v1247
    %1268 = vmatmul.f32.gmra.mxu0 %v1250
    %v1269 = vpop.f32.mrf.mxu0
    %v1270 = vadd.f32 0.0, %v1269
    %1271 = vdwg.mxu0
    %v1272 = vld [vmem:[%s1024 + $0x80] sm:$0xff]
    %v1274 = vsel %vm144, %v1244, 0
    %v1277 = vsel %vm144, %v1270, 0
    %1279 = vmatpush.msra.mxu0 0.0
    %1280 = vmatpush.msra.mxu0 0.0
    %1281 = vmatpush.msra.mxu0 0.0
    %1282 = vmatpush.msra.mxu0 0.0
    %1283 = vmatpush.msra.mxu0 0.0
    %1284 = vmatpush.msra.mxu0 0.0
    %1285 = vmatpush.msra.mxu0 0.0
    %1286 = vmatpush.msra.mxu0 0.0
    %1287 = vmatpush.msra.mxu0 0.0
    %1288 = vmatpush.msra.mxu0 0.0
    %1289 = vmatpush.msra.mxu0 0.0
    %1290 = vmatpush.msra.mxu0 0.0
    %1291 = vmatpush.msra.mxu0 0.0
    %1292 = vmatpush.msra.mxu0 0.0
    %1293 = vmatpush.msra.mxu0 0.0
    %1294 = vmatpush.msra.mxu0 %v1272
    %1295 = vmatmul.f32.gmra.mxu0 %v1274
    %v1296 = vpop.f32.mrf.mxu0
    %v1297 = vadd.f32 0.0, %v1296
    %1298 = vmatmul.f32.gmra.mxu0 %v1277
    %v1299 = vpop.f32.mrf.mxu0
    %v1300 = vadd.f32 0.0, %v1299
    %1301 = vdwg.mxu0
    %v1302 = vadd.f32 %v1012, %v1297
    %v1303 = vadd.f32 %v1013, %v1300
    %1304 = vrot.lane.b32.xlu0 %v1113, 120
    %v1305 = vpop.permute.xlu0 %1304
    %1306 = vrot.lane.b32.xlu0 %v1113, 88
    %v1307 = vpop.permute.xlu0 %1306
    %v1308 = vsel %vm144, %v1305, 0
    %v1310 = vsel %vm144, %v1307, 0
    %1312 = vmatpush.xpose.msra.mxu0 0.0
    %1313 = vmatpush.xpose.msra.mxu0 0.0
    %1314 = vmatpush.xpose.msra.mxu0 0.0
    %1315 = vmatpush.xpose.msra.mxu0 0.0
    %1316 = vmatpush.xpose.msra.mxu0 0.0
    %1317 = vmatpush.xpose.msra.mxu0 0.0
    %1318 = vmatpush.xpose.msra.mxu0 0.0
    %1319 = vmatpush.xpose.msra.mxu0 0.0
    %1320 = vmatpush.xpose.msra.mxu0 0.0
    %1321 = vmatpush.xpose.msra.mxu0 0.0
    %1322 = vmatpush.xpose.msra.mxu0 0.0
    %1323 = vmatpush.xpose.msra.mxu0 0.0
    %1324 = vmatpush.xpose.msra.mxu0 0.0
    %1325 = vmatpush.xpose.msra.mxu0 0.0
    %1326 = vmatpush.xpose.msra.mxu0 0.0
    %1327 = vmatpush.xpose.msra.mxu0 %v1310
    %1328 = vmatmul.f32.gmra.mxu0 %v1308
    %v1329 = vpop.f32.mrf.mxu0
    %v1330 = vadd.f32 0.0, %v1329
    %1331 = vdwg.mxu0
    %1332 = vrot.lane.b32.xlu0 %v1116, 120
    %v1333 = vpop.permute.xlu0 %1332
    %1334 = vrot.lane.b32.xlu0 %v1116, 88
    %v1335 = vpop.permute.xlu0 %1334
    %v1336 = vsel %vm144, %v1333, 0
    %v1338 = vsel %vm144, %v1335, 0
    %1340 = vmatpush.xpose.msra.mxu0 0.0
    %1341 = vmatpush.xpose.msra.mxu0 0.0
    %1342 = vmatpush.xpose.msra.mxu0 0.0
    %1343 = vmatpush.xpose.msra.mxu0 0.0
    %1344 = vmatpush.xpose.msra.mxu0 0.0
    %1345 = vmatpush.xpose.msra.mxu0 0.0
    %1346 = vmatpush.xpose.msra.mxu0 0.0
    %1347 = vmatpush.xpose.msra.mxu0 0.0
    %1348 = vmatpush.xpose.msra.mxu0 0.0
    %1349 = vmatpush.xpose.msra.mxu0 0.0
    %1350 = vmatpush.xpose.msra.mxu0 0.0
    %1351 = vmatpush.xpose.msra.mxu0 0.0
    %1352 = vmatpush.xpose.msra.mxu0 0.0
    %1353 = vmatpush.xpose.msra.mxu0 0.0
    %1354 = vmatpush.xpose.msra.mxu0 0.0
    %1355 = vmatpush.xpose.msra.mxu0 %v1338
    %1356 = vmatmul.f32.gmra.mxu0 %v1336
    %v1357 = vpop.f32.mrf.mxu0
    %v1358 = vadd.f32 0.0, %v1357
    %1359 = vdwg.mxu0
    %v1360 = vsel %vm144, %v1330, -inf
    %1361 = vmax.xlane.f32.xlu0 %v1360
    %v1362 = vpop.xlane.xlu0 %1361
    %v1363 = vsel %vm144, %v1358, -inf
    %1364 = vmax.xlane.f32.xlu0 %v1363
    %v1365 = vpop.xlane.xlu0 %1364
    %v1366 = vsub.f32 %v1330, %v1362
    %v1367 = vsub.f32 %v1358, %v1365
    %v1368 = vmul.f32 %v1366, 1.442695
    %v1369 = vpow.pop %v1368
    %v1370 = vmul.f32 %v1367, 1.442695
    %v1371 = vpow.pop %v1370
    %v1372 = vsel %vm144, %v1369, 0.0
    %1373 = vadd.xlane.f32.xlu0 %v1372
    %v1374 = vpop.xlane.xlu0 %1373
    %v1375 = vsel %vm144, %v1371, 0.0
    %1376 = vadd.xlane.f32.xlu0 %v1375
    %v1377 = vpop.xlane.xlu0 %1376
    %v1378 = vrcp.pop %v1374
    %v1379 = vmul.f32 %v1374, %v1378
    %v1380 = vsub.f32 1.0, %v1379
    %v1381 = vmul.f32 %v1378, %v1380
    %v1382 = vadd.f32 %v1378, %v1381
    %vm1383 = vweird.f32 %v1374
    %vm1384 = vweird.f32 %v1378
    %vm1385 = vmor %vm1383, %vm1384
    %v1386 = vsel %vm1385, %v1378, %v1382
    %v1387 = vand.u32 2147483647, %v1374
    %vm1388 = vcmp.eq.f32.partialorder %v1387, 8.507059e+37
    %v1389 = vand.u32 %v1374, 2147483648
    %v1390 = vor.u32 1.1754944e-38, %v1389
    %v1391 = vsel %vm1388, %v1390, %v1386
    %v1392 = vrcp.pop %v1377
    %v1393 = vmul.f32 %v1377, %v1392
    %v1394 = vsub.f32 1.0, %v1393
    %v1395 = vmul.f32 %v1392, %v1394
    %v1396 = vadd.f32 %v1392, %v1395
    %vm1397 = vweird.f32 %v1377
    %vm1398 = vweird.f32 %v1392
    %vm1399 = vmor %vm1397, %vm1398
    %v1400 = vsel %vm1399, %v1392, %v1396
    %v1401 = vand.u32 2147483647, %v1377
    %vm1402 = vcmp.eq.f32.partialorder %v1401, 8.507059e+37
    %v1403 = vand.u32 %v1377, 2147483648
    %v1404 = vor.u32 1.1754944e-38, %v1403
    %v1405 = vsel %vm1402, %v1404, %v1400
    %v1406 = vmul.f32 %v1369, %v1391
    %v1407 = vmul.f32 %v1371, %v1405
    %1408 = vrot.lane.b32.xlu0 %v1113, 56
    %v1409 = vpop.permute.xlu0 %1408
    %v1412 = vsel %vm144, %v1406, 0
    %1414 = vmatpush.msra.mxu0 0.0
    %1415 = vmatpush.msra.mxu0 0.0
    %1416 = vmatpush.msra.mxu0 0.0
    %1417 = vmatpush.msra.mxu0 0.0
    %1418 = vmatpush.msra.mxu0 0.0
    %1419 = vmatpush.msra.mxu0 0.0
    %1420 = vmatpush.msra.mxu0 0.0
    %1421 = vmatpush.msra.mxu0 0.0
    %1422 = vmatpush.msra.mxu0 0.0
    %1423 = vmatpush.msra.mxu0 0.0
    %1424 = vmatpush.msra.mxu0 0.0
    %1425 = vmatpush.msra.mxu0 0.0
    %1426 = vmatpush.msra.mxu0 0.0
    %1427 = vmatpush.msra.mxu0 0.0
    %1428 = vmatpush.msra.mxu0 0.0
    %1429 = vmatpush.msra.mxu0 %v1409
    %1430 = vmatmul.f32.gmra.mxu0 %v1412
    %v1431 = vpop.f32.mrf.mxu0
    %v1432 = vadd.f32 0.0, %v1431
    %1433 = vdwg.mxu0
    %1434 = vrot.lane.b32.xlu0 %v1116, 56
    %v1435 = vpop.permute.xlu0 %1434
    %v1438 = vsel %vm144, %v1407, 0
    %1440 = vmatpush.msra.mxu0 0.0
    %1441 = vmatpush.msra.mxu0 0.0
    %1442 = vmatpush.msra.mxu0 0.0
    %1443 = vmatpush.msra.mxu0 0.0
    %1444 = vmatpush.msra.mxu0 0.0
    %1445 = vmatpush.msra.mxu0 0.0
    %1446 = vmatpush.msra.mxu0 0.0
    %1447 = vmatpush.msra.mxu0 0.0
    %1448 = vmatpush.msra.mxu0 0.0
    %1449 = vmatpush.msra.mxu0 0.0
    %1450 = vmatpush.msra.mxu0 0.0
    %1451 = vmatpush.msra.mxu0 0.0
    %1452 = vmatpush.msra.mxu0 0.0
    %1453 = vmatpush.msra.mxu0 0.0
    %1454 = vmatpush.msra.mxu0 0.0
    %1455 = vmatpush.msra.mxu0 %v1435
    %1456 = vmatmul.f32.gmra.mxu0 %v1438
    %v1457 = vpop.f32.mrf.mxu0
    %v1458 = vadd.f32 0.0, %v1457
    %1459 = vdwg.mxu0
    %v1460 = vld [vmem:[%s1024 + $0x88] sm:$0xff]
    %v1462 = vsel %vm144, %v1432, 0
    %v1465 = vsel %vm144, %v1458, 0
    %1467 = vmatpush.msra.mxu0 0.0
    %1468 = vmatpush.msra.mxu0 0.0
    %1469 = vmatpush.msra.mxu0 0.0
    %1470 = vmatpush.msra.mxu0 0.0
    %1471 = vmatpush.msra.mxu0 0.0
    %1472 = vmatpush.msra.mxu0 0.0
    %1473 = vmatpush.msra.mxu0 0.0
    %1474 = vmatpush.msra.mxu0 0.0
    %1475 = vmatpush.msra.mxu0 0.0
    %1476 = vmatpush.msra.mxu0 0.0
    %1477 = vmatpush.msra.mxu0 0.0
    %1478 = vmatpush.msra.mxu0 0.0
    %1479 = vmatpush.msra.mxu0 0.0
    %1480 = vmatpush.msra.mxu0 0.0
    %1481 = vmatpush.msra.mxu0 0.0
    %1482 = vmatpush.msra.mxu0 %v1460
    %1483 = vmatmul.f32.gmra.mxu0 %v1462
    %v1484 = vpop.f32.mrf.mxu0
    %v1485 = vadd.f32 0.0, %v1484
    %1486 = vmatmul.f32.gmra.mxu0 %v1465
    %v1487 = vpop.f32.mrf.mxu0
    %v1488 = vadd.f32 0.0, %v1487
    %1489 = vdwg.mxu0
    %v1490 = vadd.f32 %v1302, %v1485
    %v1491 = vadd.f32 %v1303, %v1488
    %1492 = vrot.lane.b32.xlu0 %v1113, 112
    %v1493 = vpop.permute.xlu0 %1492
    %1494 = vrot.lane.b32.xlu0 %v1113, 80
    %v1495 = vpop.permute.xlu0 %1494
    %v1496 = vsel %vm144, %v1493, 0
    %v1498 = vsel %vm144, %v1495, 0
    %1500 = vmatpush.xpose.msra.mxu0 0.0
    %1501 = vmatpush.xpose.msra.mxu0 0.0
    %1502 = vmatpush.xpose.msra.mxu0 0.0
    %1503 = vmatpush.xpose.msra.mxu0 0.0
    %1504 = vmatpush.xpose.msra.mxu0 0.0
    %1505 = vmatpush.xpose.msra.mxu0 0.0
    %1506 = vmatpush.xpose.msra.mxu0 0.0
    %1507 = vmatpush.xpose.msra.mxu0 0.0
    %1508 = vmatpush.xpose.msra.mxu0 0.0
    %1509 = vmatpush.xpose.msra.mxu0 0.0
    %1510 = vmatpush.xpose.msra.mxu0 0.0
    %1511 = vmatpush.xpose.msra.mxu0 0.0
    %1512 = vmatpush.xpose.msra.mxu0 0.0
    %1513 = vmatpush.xpose.msra.mxu0 0.0
    %1514 = vmatpush.xpose.msra.mxu0 0.0
    %1515 = vmatpush.xpose.msra.mxu0 %v1498
    %1516 = vmatmul.f32.gmra.mxu0 %v1496
    %v1517 = vpop.f32.mrf.mxu0
    %v1518 = vadd.f32 0.0, %v1517
    %1519 = vdwg.mxu0
    %1520 = vrot.lane.b32.xlu0 %v1116, 112
    %v1521 = vpop.permute.xlu0 %1520
    %1522 = vrot.lane.b32.xlu0 %v1116, 80
    %v1523 = vpop.permute.xlu0 %1522
    %v1524 = vsel %vm144, %v1521, 0
    %v1526 = vsel %vm144, %v1523, 0
    %1528 = vmatpush.xpose.msra.mxu0 0.0
    %1529 = vmatpush.xpose.msra.mxu0 0.0
    %1530 = vmatpush.xpose.msra.mxu0 0.0
    %1531 = vmatpush.xpose.msra.mxu0 0.0
    %1532 = vmatpush.xpose.msra.mxu0 0.0
    %1533 = vmatpush.xpose.msra.mxu0 0.0
    %1534 = vmatpush.xpose.msra.mxu0 0.0
    %1535 = vmatpush.xpose.msra.mxu0 0.0
    %1536 = vmatpush.xpose.msra.mxu0 0.0
    %1537 = vmatpush.xpose.msra.mxu0 0.0
    %1538 = vmatpush.xpose.msra.mxu0 0.0
    %1539 = vmatpush.xpose.msra.mxu0 0.0
    %1540 = vmatpush.xpose.msra.mxu0 0.0
    %1541 = vmatpush.xpose.msra.mxu0 0.0
    %1542 = vmatpush.xpose.msra.mxu0 0.0
    %1543 = vmatpush.xpose.msra.mxu0 %v1526
    %1544 = vmatmul.f32.gmra.mxu0 %v1524
    %v1545 = vpop.f32.mrf.mxu0
    %v1546 = vadd.f32 0.0, %v1545
    %1547 = vdwg.mxu0
    %v1548 = vsel %vm144, %v1518, -inf
    %1549 = vmax.xlane.f32.xlu0 %v1548
    %v1550 = vpop.xlane.xlu0 %1549
    %v1551 = vsel %vm144, %v1546, -inf
    %1552 = vmax.xlane.f32.xlu0 %v1551
    %v1553 = vpop.xlane.xlu0 %1552
    %v1554 = vsub.f32 %v1518, %v1550
    %v1555 = vsub.f32 %v1546, %v1553
    %v1556 = vmul.f32 %v1554, 1.442695
    %v1557 = vpow.pop %v1556
    %v1558 = vmul.f32 %v1555, 1.442695
    %v1559 = vpow.pop %v1558
    %v1560 = vsel %vm144, %v1557, 0.0
    %1561 = vadd.xlane.f32.xlu0 %v1560
    %v1562 = vpop.xlane.xlu0 %1561
    %v1563 = vsel %vm144, %v1559, 0.0
    %1564 = vadd.xlane.f32.xlu0 %v1563
    %v1565 = vpop.xlane.xlu0 %1564
    %v1566 = vrcp.pop %v1562
    %v1567 = vmul.f32 %v1562, %v1566
    %v1568 = vsub.f32 1.0, %v1567
    %v1569 = vmul.f32 %v1566, %v1568
    %v1570 = vadd.f32 %v1566, %v1569
    %vm1571 = vweird.f32 %v1562
    %vm1572 = vweird.f32 %v1566
    %vm1573 = vmor %vm1571, %vm1572
    %v1574 = vsel %vm1573, %v1566, %v1570
    %v1575 = vand.u32 2147483647, %v1562
    %vm1576 = vcmp.eq.f32.partialorder %v1575, 8.507059e+37
    %v1577 = vand.u32 %v1562, 2147483648
    %v1578 = vor.u32 1.1754944e-38, %v1577
    %v1579 = vsel %vm1576, %v1578, %v1574
    %v1580 = vrcp.pop %v1565
    %v1581 = vmul.f32 %v1565, %v1580
    %v1582 = vsub.f32 1.0, %v1581
    %v1583 = vmul.f32 %v1580, %v1582
    %v1584 = vadd.f32 %v1580, %v1583
    %vm1585 = vweird.f32 %v1565
    %vm1586 = vweird.f32 %v1580
    %vm1587 = vmor %vm1585, %vm1586
    %v1588 = vsel %vm1587, %v1580, %v1584
    %v1589 = vand.u32 2147483647, %v1565
    %vm1590 = vcmp.eq.f32.partialorder %v1589, 8.507059e+37
    %v1591 = vand.u32 %v1565, 2147483648
    %v1592 = vor.u32 1.1754944e-38, %v1591
    %v1593 = vsel %vm1590, %v1592, %v1588
    %v1594 = vmul.f32 %v1557, %v1579
    %v1595 = vmul.f32 %v1559, %v1593
    %1596 = vrot.lane.b32.xlu0 %v1113, 48
    %v1597 = vpop.permute.xlu0 %1596
    %v1600 = vsel %vm144, %v1594, 0
    %1602 = vmatpush.msra.mxu0 0.0
    %1603 = vmatpush.msra.mxu0 0.0
    %1604 = vmatpush.msra.mxu0 0.0
    %1605 = vmatpush.msra.mxu0 0.0
    %1606 = vmatpush.msra.mxu0 0.0
    %1607 = vmatpush.msra.mxu0 0.0
    %1608 = vmatpush.msra.mxu0 0.0
    %1609 = vmatpush.msra.mxu0 0.0
    %1610 = vmatpush.msra.mxu0 0.0
    %1611 = vmatpush.msra.mxu0 0.0
    %1612 = vmatpush.msra.mxu0 0.0
    %1613 = vmatpush.msra.mxu0 0.0
    %1614 = vmatpush.msra.mxu0 0.0
    %1615 = vmatpush.msra.mxu0 0.0
    %1616 = vmatpush.msra.mxu0 0.0
    %1617 = vmatpush.msra.mxu0 %v1597
    %1618 = vmatmul.f32.gmra.mxu0 %v1600
    %v1619 = vpop.f32.mrf.mxu0
    %v1620 = vadd.f32 0.0, %v1619
    %1621 = vdwg.mxu0
    %1622 = vrot.lane.b32.xlu0 %v1116, 48
    %v1623 = vpop.permute.xlu0 %1622
    %v1626 = vsel %vm144, %v1595, 0
    %1628 = vmatpush.msra.mxu0 0.0
    %1629 = vmatpush.msra.mxu0 0.0
    %1630 = vmatpush.msra.mxu0 0.0
    %1631 = vmatpush.msra.mxu0 0.0
    %1632 = vmatpush.msra.mxu0 0.0
    %1633 = vmatpush.msra.mxu0 0.0
    %1634 = vmatpush.msra.mxu0 0.0
    %1635 = vmatpush.msra.mxu0 0.0
    %1636 = vmatpush.msra.mxu0 0.0
    %1637 = vmatpush.msra.mxu0 0.0
    %1638 = vmatpush.msra.mxu0 0.0
    %1639 = vmatpush.msra.mxu0 0.0
    %1640 = vmatpush.msra.mxu0 0.0
    %1641 = vmatpush.msra.mxu0 0.0
    %1642 = vmatpush.msra.mxu0 0.0
    %1643 = vmatpush.msra.mxu0 %v1623
    %1644 = vmatmul.f32.gmra.mxu0 %v1626
    %v1645 = vpop.f32.mrf.mxu0
    %v1646 = vadd.f32 0.0, %v1645
    %1647 = vdwg.mxu0
    %v1648 = vld [vmem:[%s1024 + $0x90] sm:$0xff]
    %v1650 = vsel %vm144, %v1620, 0
    %v1653 = vsel %vm144, %v1646, 0
    %1655 = vmatpush.msra.mxu0 0.0
    %1656 = vmatpush.msra.mxu0 0.0
    %1657 = vmatpush.msra.mxu0 0.0
    %1658 = vmatpush.msra.mxu0 0.0
    %1659 = vmatpush.msra.mxu0 0.0
    %1660 = vmatpush.msra.mxu0 0.0
    %1661 = vmatpush.msra.mxu0 0.0
    %1662 = vmatpush.msra.mxu0 0.0
    %1663 = vmatpush.msra.mxu0 0.0
    %1664 = vmatpush.msra.mxu0 0.0
    %1665 = vmatpush.msra.mxu0 0.0
    %1666 = vmatpush.msra.mxu0 0.0
    %1667 = vmatpush.msra.mxu0 0.0
    %1668 = vmatpush.msra.mxu0 0.0
    %1669 = vmatpush.msra.mxu0 0.0
    %1670 = vmatpush.msra.mxu0 %v1648
    %1671 = vmatmul.f32.gmra.mxu0 %v1650
    %v1672 = vpop.f32.mrf.mxu0
    %v1673 = vadd.f32 0.0, %v1672
    %1674 = vmatmul.f32.gmra.mxu0 %v1653
    %v1675 = vpop.f32.mrf.mxu0
    %v1676 = vadd.f32 0.0, %v1675
    %1677 = vdwg.mxu0
    %v1678 = vadd.f32 %v1490, %v1673
    %v1679 = vadd.f32 %v1491, %v1676
    %1680 = vrot.lane.b32.xlu0 %v1113, 104
    %v1681 = vpop.permute.xlu0 %1680
    %1682 = vrot.lane.b32.xlu0 %v1113, 72
    %v1683 = vpop.permute.xlu0 %1682
    %v1684 = vsel %vm144, %v1681, 0
    %v1686 = vsel %vm144, %v1683, 0
    %1688 = vmatpush.xpose.msra.mxu0 0.0
    %1689 = vmatpush.xpose.msra.mxu0 0.0
    %1690 = vmatpush.xpose.msra.mxu0 0.0
    %1691 = vmatpush.xpose.msra.mxu0 0.0
    %1692 = vmatpush.xpose.msra.mxu0 0.0
    %1693 = vmatpush.xpose.msra.mxu0 0.0
    %1694 = vmatpush.xpose.msra.mxu0 0.0
    %1695 = vmatpush.xpose.msra.mxu0 0.0
    %1696 = vmatpush.xpose.msra.mxu0 0.0
    %1697 = vmatpush.xpose.msra.mxu0 0.0
    %1698 = vmatpush.xpose.msra.mxu0 0.0
    %1699 = vmatpush.xpose.msra.mxu0 0.0
    %1700 = vmatpush.xpose.msra.mxu0 0.0
    %1701 = vmatpush.xpose.msra.mxu0 0.0
    %1702 = vmatpush.xpose.msra.mxu0 0.0
    %1703 = vmatpush.xpose.msra.mxu0 %v1686
    %1704 = vmatmul.f32.gmra.mxu0 %v1684
    %v1705 = vpop.f32.mrf.mxu0
    %v1706 = vadd.f32 0.0, %v1705
    %1707 = vdwg.mxu0
    %1708 = vrot.lane.b32.xlu0 %v1116, 104
    %v1709 = vpop.permute.xlu0 %1708
    %1710 = vrot.lane.b32.xlu0 %v1116, 72
    %v1711 = vpop.permute.xlu0 %1710
    %v1712 = vsel %vm144, %v1709, 0
    %v1714 = vsel %vm144, %v1711, 0
    %1716 = vmatpush.xpose.msra.mxu0 0.0
    %1717 = vmatpush.xpose.msra.mxu0 0.0
    %1718 = vmatpush.xpose.msra.mxu0 0.0
    %1719 = vmatpush.xpose.msra.mxu0 0.0
    %1720 = vmatpush.xpose.msra.mxu0 0.0
    %1721 = vmatpush.xpose.msra.mxu0 0.0
    %1722 = vmatpush.xpose.msra.mxu0 0.0
    %1723 = vmatpush.xpose.msra.mxu0 0.0
    %1724 = vmatpush.xpose.msra.mxu0 0.0
    %1725 = vmatpush.xpose.msra.mxu0 0.0
    %1726 = vmatpush.xpose.msra.mxu0 0.0
    %1727 = vmatpush.xpose.msra.mxu0 0.0
    %1728 = vmatpush.xpose.msra.mxu0 0.0
    %1729 = vmatpush.xpose.msra.mxu0 0.0
    %1730 = vmatpush.xpose.msra.mxu0 0.0
    %1731 = vmatpush.xpose.msra.mxu0 %v1714
    %1732 = vmatmul.f32.gmra.mxu0 %v1712
    %v1733 = vpop.f32.mrf.mxu0
    %v1734 = vadd.f32 0.0, %v1733
    %1735 = vdwg.mxu0
    %v1736 = vsel %vm144, %v1706, -inf
    %1737 = vmax.xlane.f32.xlu0 %v1736
    %v1738 = vpop.xlane.xlu0 %1737
    %v1739 = vsel %vm144, %v1734, -inf
    %1740 = vmax.xlane.f32.xlu0 %v1739
    %v1741 = vpop.xlane.xlu0 %1740
    %v1742 = vsub.f32 %v1706, %v1738
    %v1743 = vsub.f32 %v1734, %v1741
    %v1744 = vmul.f32 %v1742, 1.442695
    %v1745 = vpow.pop %v1744
    %v1746 = vmul.f32 %v1743, 1.442695
    %v1747 = vpow.pop %v1746
    %v1748 = vsel %vm144, %v1745, 0.0
    %1749 = vadd.xlane.f32.xlu0 %v1748
    %v1750 = vpop.xlane.xlu0 %1749
    %v1751 = vsel %vm144, %v1747, 0.0
    %1752 = vadd.xlane.f32.xlu0 %v1751
    %v1753 = vpop.xlane.xlu0 %1752
    %v1754 = vrcp.pop %v1750
    %v1755 = vmul.f32 %v1750, %v1754
    %v1756 = vsub.f32 1.0, %v1755
    %v1757 = vmul.f32 %v1754, %v1756
    %v1758 = vadd.f32 %v1754, %v1757
    %vm1759 = vweird.f32 %v1750
    %vm1760 = vweird.f32 %v1754
    %vm1761 = vmor %vm1759, %vm1760
    %v1762 = vsel %vm1761, %v1754, %v1758
    %v1763 = vand.u32 2147483647, %v1750
    %vm1764 = vcmp.eq.f32.partialorder %v1763, 8.507059e+37
    %v1765 = vand.u32 %v1750, 2147483648
    %v1766 = vor.u32 1.1754944e-38, %v1765
    %v1767 = vsel %vm1764, %v1766, %v1762
    %v1768 = vrcp.pop %v1753
    %v1769 = vmul.f32 %v1753, %v1768
    %v1770 = vsub.f32 1.0, %v1769
    %v1771 = vmul.f32 %v1768, %v1770
    %v1772 = vadd.f32 %v1768, %v1771
    %vm1773 = vweird.f32 %v1753
    %vm1774 = vweird.f32 %v1768
    %vm1775 = vmor %vm1773, %vm1774
    %v1776 = vsel %vm1775, %v1768, %v1772
    %v1777 = vand.u32 2147483647, %v1753
    %vm1778 = vcmp.eq.f32.partialorder %v1777, 8.507059e+37
    %v1779 = vand.u32 %v1753, 2147483648
    %v1780 = vor.u32 1.1754944e-38, %v1779
    %v1781 = vsel %vm1778, %v1780, %v1776
    %v1782 = vmul.f32 %v1745, %v1767
    %v1783 = vmul.f32 %v1747, %v1781
    %1784 = vrot.lane.b32.xlu0 %v1113, 40
    %v1785 = vpop.permute.xlu0 %1784
    %v1788 = vsel %vm144, %v1782, 0
    %1790 = vmatpush.msra.mxu0 0.0
    %1791 = vmatpush.msra.mxu0 0.0
    %1792 = vmatpush.msra.mxu0 0.0
    %1793 = vmatpush.msra.mxu0 0.0
    %1794 = vmatpush.msra.mxu0 0.0
    %1795 = vmatpush.msra.mxu0 0.0
    %1796 = vmatpush.msra.mxu0 0.0
    %1797 = vmatpush.msra.mxu0 0.0
    %1798 = vmatpush.msra.mxu0 0.0
    %1799 = vmatpush.msra.mxu0 0.0
    %1800 = vmatpush.msra.mxu0 0.0
    %1801 = vmatpush.msra.mxu0 0.0
    %1802 = vmatpush.msra.mxu0 0.0
    %1803 = vmatpush.msra.mxu0 0.0
    %1804 = vmatpush.msra.mxu0 0.0
    %1805 = vmatpush.msra.mxu0 %v1785
    %1806 = vmatmul.f32.gmra.mxu0 %v1788
    %v1807 = vpop.f32.mrf.mxu0
    %v1808 = vadd.f32 0.0, %v1807
    %1809 = vdwg.mxu0
    %1810 = vrot.lane.b32.xlu0 %v1116, 40
    %v1811 = vpop.permute.xlu0 %1810
    %v1814 = vsel %vm144, %v1783, 0
    %1816 = vmatpush.msra.mxu0 0.0
    %1817 = vmatpush.msra.mxu0 0.0
    %1818 = vmatpush.msra.mxu0 0.0
    %1819 = vmatpush.msra.mxu0 0.0
    %1820 = vmatpush.msra.mxu0 0.0
    %1821 = vmatpush.msra.mxu0 0.0
    %1822 = vmatpush.msra.mxu0 0.0
    %1823 = vmatpush.msra.mxu0 0.0
    %1824 = vmatpush.msra.mxu0 0.0
    %1825 = vmatpush.msra.mxu0 0.0
    %1826 = vmatpush.msra.mxu0 0.0
    %1827 = vmatpush.msra.mxu0 0.0
    %1828 = vmatpush.msra.mxu0 0.0
    %1829 = vmatpush.msra.mxu0 0.0
    %1830 = vmatpush.msra.mxu0 0.0
    %1831 = vmatpush.msra.mxu0 %v1811
    %1832 = vmatmul.f32.gmra.mxu0 %v1814
    %v1833 = vpop.f32.mrf.mxu0
    %v1834 = vadd.f32 0.0, %v1833
    %1835 = vdwg.mxu0
    %v1836 = vld [vmem:[%s1024 + $0x98] sm:$0xff]
    %v1838 = vsel %vm144, %v1808, 0
    %v1841 = vsel %vm144, %v1834, 0
    %1843 = vmatpush.msra.mxu0 0.0
    %1844 = vmatpush.msra.mxu0 0.0
    %1845 = vmatpush.msra.mxu0 0.0
    %1846 = vmatpush.msra.mxu0 0.0
    %1847 = vmatpush.msra.mxu0 0.0
    %1848 = vmatpush.msra.mxu0 0.0
    %1849 = vmatpush.msra.mxu0 0.0
    %1850 = vmatpush.msra.mxu0 0.0
    %1851 = vmatpush.msra.mxu0 0.0
    %1852 = vmatpush.msra.mxu0 0.0
    %1853 = vmatpush.msra.mxu0 0.0
    %1854 = vmatpush.msra.mxu0 0.0
    %1855 = vmatpush.msra.mxu0 0.0
    %1856 = vmatpush.msra.mxu0 0.0
    %1857 = vmatpush.msra.mxu0 0.0
    %1858 = vmatpush.msra.mxu0 %v1836
    %1859 = vmatmul.f32.gmra.mxu0 %v1838
    %v1860 = vpop.f32.mrf.mxu0
    %v1861 = vadd.f32 0.0, %v1860
    %1862 = vmatmul.f32.gmra.mxu0 %v1841
    %v1863 = vpop.f32.mrf.mxu0
    %v1864 = vadd.f32 0.0, %v1863
    %1865 = vdwg.mxu0
    %v1866 = vadd.f32 %v1678, %v1861
    %v1867 = vadd.f32 %v1679, %v1864
    %v1868 = vadd.f32 %v1005, %v1866
    %v1869 = vadd.f32 %v1006, %v1867
    %v1870 = vsel %vm56, %v1868, 0.0
    %1871 = vadd.xlane.f32.xlu0 %v1870
    %v1872 = vpop.xlane.xlu0 %1871
    %v1873 = vsel %vm56, %v1869, 0.0
    %1874 = vadd.xlane.f32.xlu0 %v1873
    %v1875 = vpop.xlane.xlu0 %1874
    %v1876 = vmul.f32 %v1872, %v69
    %v1877 = vmul.f32 %v1875, %v69
    %v1878 = vsub.f32 %v1868, %v1876
    %v1879 = vsub.f32 %v1869, %v1877
    %v1880 = vmul.f32 %v1878, %v1878
    %v1881 = vmul.f32 %v1879, %v1879
    %v1882 = vsel %vm56, %v1880, 0.0
    %1883 = vadd.xlane.f32.xlu0 %v1882
    %v1884 = vpop.xlane.xlu0 %1883
    %v1885 = vsel %vm56, %v1881, 0.0
    %1886 = vadd.xlane.f32.xlu0 %v1885
    %v1887 = vpop.xlane.xlu0 %1886
    %v1888 = vmul.f32 %v1884, %v69
    %v1889 = vmul.f32 %v1887, %v69
    %v1890 = vadd.f32 %v1888, 1e-05
    %v1891 = vadd.f32 %v1889, 1e-05
    %v1892 = vrsqrt.pop %v1890
    %v1893 = vmul.f32 %v1892, %v1890
    %v1894 = vmul.f32 %v1893, %v1892
    %v1895 = vmul.f32 0.5, %v1894
    %v1896 = vsub.f32 1.5, %v1895
    %v1897 = vmul.f32 %v1892, %v1896
    %vm1898 = vweird.f32 %v1890
    %vm1899 = vweird.f32 %v1892
    %vm1900 = vmor %vm1898, %vm1899
    %v1901 = vsel %vm1900, %v1892, %v1897
    %v1902 = vrsqrt.pop %v1891
    %v1903 = vmul.f32 %v1902, %v1891
    %v1904 = vmul.f32 %v1903, %v1902
    %v1905 = vmul.f32 0.5, %v1904
    %v1906 = vsub.f32 1.5, %v1905
    %v1907 = vmul.f32 %v1902, %v1906
    %vm1908 = vweird.f32 %v1891
    %vm1909 = vweird.f32 %v1902
    %vm1910 = vmor %vm1908, %vm1909
    %v1911 = vsel %vm1910, %v1902, %v1907
    %v1912 = vmul.f32 %v1878, %v1901
    %v1913 = vmul.f32 %v1879, %v1911
    %v1914 = vmul.f32 %v1912, %v1020
    %v1915 = vmul.f32 %v1913, %v1021
    %v1916 = vadd.f32 %v1914, %v1022
    %v1917 = vadd.f32 %v1915, %v1023
    %v1919 = vsel %vm56, %v1916, 0
    %v1922 = vsel %vm56, %v1917, 0
    %1924 = vmatpush.msra.mxu0 0.0
    %1925 = vmatpush.msra.mxu0 0.0
    %1926 = vmatpush.msra.mxu0 0.0
    %1927 = vmatpush.msra.mxu0 0.0
    %1928 = vmatpush.msra.mxu0 0.0
    %1929 = vmatpush.msra.mxu0 0.0
    %1930 = vmatpush.msra.mxu0 0.0
    %1931 = vmatpush.msra.mxu0 0.0
    %1932 = vmatpush.msra.mxu0 0.0
    %1933 = vmatpush.msra.mxu0 0.0
    %1934 = vmatpush.msra.mxu0 0.0
    %1935 = vmatpush.msra.mxu0 0.0
    %1936 = vmatpush.msra.mxu0 %v1032
    %1937 = vmatpush.msra.mxu0 %v1031
    %1938 = vmatpush.msra.mxu0 %v1030
    %1939 = vmatpush.msra.mxu0 %v1029
    %1940 = vmatmul.f32.gmra.mxu0 %v1919
    %v1941 = vpop.f32.mrf.mxu0
    %v1942 = vadd.f32 %v1010, %v1941
    %1943 = vmatmul.f32.gmra.mxu0 %v1922
    %v1944 = vpop.f32.mrf.mxu0
    %v1945 = vadd.f32 %v1011, %v1944
    %1946 = vdwg.mxu0
    %v1947 = vmax.f32 %v1942, 0.0
    %v1948 = vmax.f32 %v1945, 0.0
    %v1950 = vsel %vm973, %v1947, 0
    %v1953 = vsel %vm973, %v1948, 0
    %1955 = vmatpush.msra.mxu0 0.0
    %1956 = vmatpush.msra.mxu0 0.0
    %1957 = vmatpush.msra.mxu0 0.0
    %1958 = vmatpush.msra.mxu0 0.0
    %1959 = vmatpush.msra.mxu0 0.0
    %1960 = vmatpush.msra.mxu0 0.0
    %1961 = vmatpush.msra.mxu0 0.0
    %1962 = vmatpush.msra.mxu0 0.0
    %1963 = vmatpush.msra.mxu0 %v1040
    %1964 = vmatpush.msra.mxu0 %v1039
    %1965 = vmatpush.msra.mxu0 %v1038
    %1966 = vmatpush.msra.mxu0 %v1037
    %1967 = vmatpush.msra.mxu0 %v1036
    %1968 = vmatpush.msra.mxu0 %v1035
    %1969 = vmatpush.msra.mxu0 %v1034
    %1970 = vmatpush.msra.mxu0 %v1033
    %1971 = vmatmul.f32.gmra.mxu0 %v1950
    %v1972 = vpop.f32.mrf.mxu0
    %v1973 = vadd.f32 0.0, %v1972
    %1974 = vmatmul.f32.gmra.mxu0 %v1953
    %v1975 = vpop.f32.mrf.mxu0
    %v1976 = vadd.f32 0.0, %v1975
    %1977 = vdwg.mxu0
    %v1978 = vadd.f32 %v1868, %v1973
    %v1979 = vadd.f32 %v1869, %v1976
    %v1980 = vadd.f32 %v1978, %v1014
    %v1981 = vadd.f32 %v1979, %v1015
    %v1982 = vsel %vm56, %v1980, 0.0
    %v1983 = vrot.slane %v1982, 4
    %v1984 = vadd.f32 %v1982, %v1983
    %v1985 = vrot.slane %v1984, 2
    %v1986 = vadd.f32 %v1984, %v1985
    %v1987 = vrot.slane %v1986, 1
    %v1988 = vadd.f32 %v1986, %v1987
    %v1989 = vsel %vm56, %v1981, 0.0
    %v1990 = vrot.slane %v1989, 4
    %v1991 = vadd.f32 %v1989, %v1990
    %v1992 = vrot.slane %v1991, 2
    %v1993 = vadd.f32 %v1991, %v1992
    %v1994 = vrot.slane %v1993, 1
    %v1995 = vadd.f32 %v1993, %v1994
    %v1996 = vmul.f32 %v1988, 0.125
    %v1997 = vmul.f32 %v1995, 0.125
    %v1998 = vld [vmem:[%s3 + $0x10] sm:$0xff]
    %v1999 = vld [vmem:[%s3 + $0x18] sm:$0xff]
    %v2000 = vld [vmem:[%s3 + $0x20] sm:$0xff]
    %v2001 = vld [vmem:[%s3 + $0x28] sm:$0xff]
    %v2002 = vld [vmem:[%s3 + $0x30] sm:$0x3]
    %vm2005 = vcmask 1041409
    %v2006 = vsel %vm2005, %v1997, %v1996
    %v2007 = vsel %vm56, %v2006, 0
    %2009 = vmatpush.msra.mxu0 0.0
    %2010 = vmatpush.msra.mxu0 0.0
    %2011 = vmatpush.msra.mxu0 0.0
    %2012 = vmatpush.msra.mxu0 0.0
    %2013 = vmatpush.msra.mxu0 0.0
    %2014 = vmatpush.msra.mxu0 0.0
    %2015 = vmatpush.msra.mxu0 0.0
    %2016 = vmatpush.msra.mxu0 0.0
    %2017 = vmatpush.msra.mxu0 0.0
    %2018 = vmatpush.msra.mxu0 0.0
    %2019 = vmatpush.msra.mxu0 0.0
    %2020 = vmatpush.msra.mxu0 0.0
    %2021 = vmatpush.msra.mxu0 %v2001
    %2022 = vmatpush.msra.mxu0 %v2000
    %2023 = vmatpush.msra.mxu0 %v1999
    %2024 = vmatpush.msra.mxu0 %v1998
    %2025 = vmatmul.f32.gmra.mxu0 %v2007
    %v2026 = vpop.f32.mrf.mxu0
    %v2027 = vadd.f32 %v2002, %v2026
    %2028 = vdwg.mxu0
    %vm2029 = vcmask 17408
    %2030 = vst.msk [vmem:[#allocation2] sm:$0x3] %vm2029, %v2027
    // Predicated region
    $region18: #{sentiment_transformer.1} parent=1 // pred_check
      _
    $region19: #{sentiment_transformer.1} parent=1 // pred_check_branch
      %2032 = sbr.rel (0) target = $region21
    $region20: #{sentiment_transformer.1} parent=1 // pred_region
      %2034 = vsyncadd [#allocation3], 0
      %s2036 = sshll.u32 [#allocation2], 4
      %s2037 = int_to_ptr.vmem [resolvable:$true] %s2036
      %s2038 = sshll.u32 %s4, 4
      %s2039 = int_to_ptr.hbm [resolvable:$true] %s2038
      %2041 = dma.vmem_to_hbm [thread:$0]  %s2037, 32, %s2039, [#allocation3]
    $region21: #{sentiment_transformer.1} parent=1 // pred_fallthru
      _
    // Predicated region
    $region22: #{sentiment_transformer.1} parent=1 // pred_check
      _
    $region23: #{sentiment_transformer.1} parent=1 // pred_check_branch
      %2043 = sbr.rel (0) target = $region25
    $region24: #{sentiment_transformer.1} parent=1 // pred_region
      %2045 = dma.done [#allocation3], 32
    $region25: #{sentiment_transformer.1} parent=1 // pred_fallthru
      _
    %2046 = vsyncpa [#allocation3], 1

</llo_original>
